<compile_context>
chip_gen: v7x
topology: tpu7x:2x2x1
jax: 0.10.0
libtpu: 0.0.40
codegen_flags: <defaults>
</compile_context>

<pallas_src>
import jax
import jax.numpy as jnp
from jax.experimental import pallas as pl
from jax.experimental.pallas import tpu as pltpu

LANE = 128
_VMEM_BUDGET = 40 * 1024 * 1024   # conservative: fits v7x's 64 MiB / TC with headroom


def _round_up(x, m):
    return ((x + m - 1) // m) * m


# ------------------------------ kernel ------------------------------------
def _disc_kernel(imgs_ref, oh_ref, embt_ref, w1_ref, w2_ref, w3_ref, c_ref, o_ref):
    """One batch tile of the discriminator MLP.

    imgs_ref : (TB, F)   f32   flattened image pixels (cast to bf16 in-kernel)
    oh_ref   : (TB, CL)  bf16  one-hot labels (CL = n_classes padded to 128)
    embt_ref : (CL, D)   bf16  Embedding -> first-Linear label slice, folded
    w1_ref   : (F, D)    int8  per-column-quantized image part of layer 1
    w2/w3    : (D, D)    int8  per-column-quantized layers 2/3
    c_ref    : (8, D)    f32   rows = [b1, b2, b3, s1, s2, s3, w4_row, b4|0...]
    o_ref    : (TB, 128) f32   sigmoid output broadcast across lanes
    """
    def leaky_relu(h):
        return jnp.maximum(h, 0.2 * h)      # == LeakyReLU(0.2) since slope < 1

    b1 = c_ref[0:1, :]
    b2 = c_ref[1:2, :]
    b3 = c_ref[2:3, :]
    s1 = c_ref[3:4, :]
    s2 = c_ref[4:5, :]
    s3 = c_ref[5:6, :]
    w4 = c_ref[6:7, :]
    b4 = c_ref[7:8, 0:1]

    # label contribution: tiny MXU dot against the folded table (exact algebra
    # for torch.cat((imgs, emb), -1) followed by the first Linear).
    emb = jnp.dot(oh_ref[...], embt_ref[...], preferred_element_type=jnp.float32)

    # layer 1: cast imgs f32->bf16 on the VPU (hidden under the MXU), int8
    # weights upcast to bf16, per-column scale folded into the epilogue.
    x = imgs_ref[...].astype(jnp.bfloat16)
    h = jnp.dot(x, w1_ref[...].astype(jnp.bfloat16),
                preferred_element_type=jnp.float32)
    h = leaky_relu(h * s1 + emb + b1)

    # layer 2 (+ Dropout(0.4): identity in eval/inference mode)
    h = jnp.dot(h.astype(jnp.bfloat16), w2_ref[...].astype(jnp.bfloat16),
                preferred_element_type=jnp.float32)
    h = leaky_relu(h * s2 + b2)

    # layer 3 (+ Dropout(0.4): identity in eval/inference mode)
    h = jnp.dot(h.astype(jnp.bfloat16), w3_ref[...].astype(jnp.bfloat16),
                preferred_element_type=jnp.float32)
    h = leaky_relu(h * s3 + b3)

    # layer 4 (D -> 1): VPU multiply + XLU lane reduction (no N=1 MXU matmul);
    # lane-dense (TB,128) store, first column sliced outside.
    logit = jnp.sum(h * w4, axis=-1, keepdims=True) + b4
    o_ref[...] = jnp.broadcast_to(jax.nn.sigmoid(logit), o_ref.shape)


# ------------------------- tile / VMEM budgeting ---------------------------
def _select_tile(B, feat, depth, n_cls_pad):
    # resident (single-buffered) weights + in-kernel bf16 upcast temporaries
    fixed = (feat * depth + 2 * depth * depth          # int8 w1 / w2 / w3
             + n_cls_pad * depth * 2                   # bf16 emb table
             + 8 * depth * 4)                          # packed consts
    fixed += (feat + 2 * depth) * depth * 2            # bf16 upcast temporaries
    # per-row streamed bytes (double-buffered) + activation temporaries
    per_row = 2 * (feat * 4 + n_cls_pad * 2 + LANE * 4) + 6 * depth * 4
    avail = max(_VMEM_BUDGET - fixed, 1 << 20)
    tb_cap = max(16, (avail // per_row) // 16 * 16)
    TB = min(_round_up(B, 16), 256, tb_cap)
    # mid/large batches: ensure >=2 grid steps so ("parallel",) can use both
    # TensorCores on v7x (no effect on single-TC v5e/v6e).
    if B >= 32 and _round_up(B, TB) // TB < 2:
        TB = max(16, _round_up((B + 1) // 2, 16))
    est = fixed + TB * per_row
    vmem_limit = int(min(48 << 20, max(32 << 20, est * 5 // 4)))
    return TB, vmem_limit


# ------------------------------ wrapper ------------------------------------
@jax.jit
def discriminator_forward(img, labels, params):
    """img: (B, C, H, W) float32, labels: (B,) int32 -> (B, 1) float32."""
    B = img.shape[0]
    depth = params["w2"].shape[0]
    feat = params["w1_img"].shape[0]
    n_cls_pad = params["embed_proj"].shape[0]

    # flatten NCHW exactly like torch `img.view(B, -1)`; keep f32 (cast in-kernel)
    imgs = img.reshape(B, -1)
    # one-hot labels: (B, CL) bf16, tiny; out-of-range labels give a zero row
    # (PyTorch nn.Embedding would raise instead).
    onehot = jax.nn.one_hot(labels, n_cls_pad, dtype=jnp.bfloat16)

    TB, vmem_limit = _select_tile(B, feat, depth, n_cls_pad)
    B_pad = _round_up(B, TB)
    if B_pad != B:
        imgs = jnp.pad(imgs, ((0, B_pad - B), (0, 0)))
        onehot = jnp.pad(onehot, ((0, B_pad - B), (0, 0)))

    def row_spec(f):                 # batch-tiled arrays (double-buffered)
        return pl.BlockSpec((TB, f), lambda i: (i, 0))

    def const_spec(shape):           # weights: fetched once, single-buffered
        return pl.BlockSpec(shape, lambda i: (0, 0), pipeline_mode=pl.Buffered(1))

    out = pl.pallas_call(
        _disc_kernel,
        out_shape=jax.ShapeDtypeStruct((B_pad, LANE), jnp.float32),
        grid_spec=pltpu.PrefetchScalarGridSpec(
            num_scalar_prefetch=0,
            grid=(B_pad // TB,),
            in_specs=[
                row_spec(feat),                      # imgs (f32)
                row_spec(n_cls_pad),                 # one-hot labels (bf16)
                const_spec((n_cls_pad, depth)),      # folded embedding table (bf16)
                const_spec((feat, depth)),           # w1_img (int8)
                const_spec((depth, depth)),          # w2 (int8)
                const_spec((depth, depth)),          # w3 (int8)
                const_spec((8, depth)),              # packed biases/scales/w4/b4 (f32)
            ],
            out_specs=row_spec(LANE),
        ),
        compiler_params=pltpu.CompilerParams(
            dimension_semantics=("parallel",),       # independent batch tiles
            vmem_limit_bytes=vmem_limit,
        ),
    )(imgs, onehot,
      params["embed_proj"], params["w1_img"], params["w2"], params["w3"],
      params["consts"])

    return out[:B, :1]


# ------------------------- deterministic params ----------------------------
def _quantize_cols(w):
    """Symmetric per-output-column int8 quantization; returns (q, scale(1,D))."""
    amax = jnp.max(jnp.abs(w), axis=0, keepdims=True)
    scale = jnp.maximum(amax, 1e-8) / 127.0
    q = jnp.clip(jnp.round(w / scale), -127.0, 127.0).astype(jnp.int8)
    return q, scale


def init_params(key, n_classes, img_feat, depth=512):
    ks = jax.random.split(key, 5)

    def lin(kw, fan_in, fan_out):
        # TODO(synk): PyTorch nn.Linear uses uniform(+-1/sqrt(fan_in)) for w AND b;
        # deterministic synthetic init is fine for this runnable example.
        w = jax.random.normal(kw, (fan_in, fan_out), jnp.float32) / jnp.sqrt(fan_in)
        b = jnp.zeros((fan_out,), jnp.float32)
        return w, b

    embed = jax.random.normal(ks[0], (n_classes, n_classes), jnp.float32)
    # rows ordered [image features | label embedding] == torch.cat((imgs, emb), -1)
    w1, b1 = lin(ks[1], img_feat + n_classes, depth)
    w2, b2 = lin(ks[2], depth, depth)
    w3, b3 = lin(ks[3], depth, depth)
    w4, b4 = lin(ks[4], depth, 1)

    # --- prepack once at init: no per-call padding / repacking -------------
    # Fold Embedding followed by the first Linear's label slice (exact algebra);
    # pad classes to a full 128-lane tile for the in-kernel one-hot MXU dot.
    n_cls_pad = _round_up(n_classes, LANE)
    w1_img = w1[:img_feat]                                  # (F, D)
    embed_proj = embed @ w1[img_feat:]                      # (n_classes, D)
    embed_proj = jnp.pad(embed_proj, ((0, n_cls_pad - n_classes), (0, 0)))

    # int8 weights with per-column scales (scales applied in the kernel epilogue)
    w1_q, s1 = _quantize_cols(w1_img)
    w2_q, s2 = _quantize_cols(w2)
    w3_q, s3 = _quantize_cols(w3)

    # pack all small per-column constants into one (8, D) f32 block
    consts = jnp.stack([
        b1, b2, b3,
        s1[0], s2[0], s3[0],
        w4[:, 0],
        jnp.zeros((depth,), jnp.float32).at[0].set(b4[0]),
    ]).astype(jnp.float32)

    return dict(
        embed_proj=embed_proj.astype(jnp.bfloat16),         # (CL, D) bf16
        w1_img=w1_q,                                        # (F, D)  int8
        w2=w2_q,                                            # (D, D)  int8
        w3=w3_q,                                            # (D, D)  int8
        consts=consts,                                      # (8, D)  f32
    )


# ------------------------------ main ---------------------------------------
if __name__ == "__main__":
    # small config consistent with the module: img_shape = (channels, imageSize, imageSize)
    B, C, H, W = 2, 1, 16, 16
    n_classes = 10
    depth = 512
    img_feat = C * H * W

    key = jax.random.PRNGKey(0)
    k_img, k_lab, k_par = jax.random.split(key, 3)

    img = jax.random.normal(k_img, (B, C, H, W), jnp.float32)
    labels = jax.random.randint(k_lab, (B,), 0, n_classes, jnp.int32)
    params = init_params(k_par, n_classes, img_feat, depth)

    validity = discriminator_forward(img, labels, params)
    jax.block_until_ready(validity)

    assert validity.shape == (B, 1)
    assert bool(jnp.all((validity >= 0.0) & (validity <= 1.0)))
    print("KERNEL_OK")
</pallas_src>

<mosaic_0001>
module attributes {stable_mosaic.version = 11 : i64} {
  func.func @_disc_kernel(%arg0: i32, %arg1: memref<16x256xf32, #tpu.memory_space<vmem>>, %arg2: memref<16x128xbf16, #tpu.memory_space<vmem>>, %arg3: memref<128x512xbf16, #tpu.memory_space<vmem>>, %arg4: memref<256x512xi8, #tpu.memory_space<vmem>>, %arg5: memref<512x512xi8, #tpu.memory_space<vmem>>, %arg6: memref<512x512xi8, #tpu.memory_space<vmem>>, %arg7: memref<8x512xf32, #tpu.memory_space<vmem>>, %arg8: memref<16x128xf32, #tpu.memory_space<vmem>>) attributes {dimension_semantics = [#tpu.dimension_semantics<parallel>], iteration_bounds = array<i64: 1>, scalar_prefetch = 0 : i64, scratch_operands = 0 : i64, tpu.core_type = #tpu.core_type<tc>, window_params = [{transform_indices = @transform_0, window_bounds = array<i64: 16, 256>}, {transform_indices = @transform_1, window_bounds = array<i64: 16, 128>}, {pipeline_mode = #tpu.pipeline_mode<synchronous>, transform_indices = @transform_2, window_bounds = array<i64: 128, 512>}, {pipeline_mode = #tpu.pipeline_mode<synchronous>, transform_indices = @transform_3, window_bounds = array<i64: 256, 512>}, {pipeline_mode = #tpu.pipeline_mode<synchronous>, transform_indices = @transform_4, window_bounds = array<i64: 512, 512>}, {pipeline_mode = #tpu.pipeline_mode<synchronous>, transform_indices = @transform_5, window_bounds = array<i64: 512, 512>}, {pipeline_mode = #tpu.pipeline_mode<synchronous>, transform_indices = @transform_6, window_bounds = array<i64: 8, 512>}, {transform_indices = @transform_7, window_bounds = array<i64: 16, 128>}]} {
    %c0 = arith.constant 0 : index
    %c0_0 = arith.constant 0 : index
    %0 = vector.load %arg7[%c0, %c0_0] : memref<8x512xf32, #tpu.memory_space<vmem>>, vector<1x512xf32>
    %c1 = arith.constant 1 : index
    %c0_1 = arith.constant 0 : index
    %1 = vector.load %arg7[%c1, %c0_1] : memref<8x512xf32, #tpu.memory_space<vmem>>, vector<1x512xf32>
    %c2 = arith.constant 2 : index
    %c0_2 = arith.constant 0 : index
    %2 = vector.load %arg7[%c2, %c0_2] : memref<8x512xf32, #tpu.memory_space<vmem>>, vector<1x512xf32>
    %c3 = arith.constant 3 : index
    %c0_3 = arith.constant 0 : index
    %3 = vector.load %arg7[%c3, %c0_3] : memref<8x512xf32, #tpu.memory_space<vmem>>, vector<1x512xf32>
    %c4 = arith.constant 4 : index
    %c0_4 = arith.constant 0 : index
    %4 = vector.load %arg7[%c4, %c0_4] : memref<8x512xf32, #tpu.memory_space<vmem>>, vector<1x512xf32>
    %c5 = arith.constant 5 : index
    %c0_5 = arith.constant 0 : index
    %5 = vector.load %arg7[%c5, %c0_5] : memref<8x512xf32, #tpu.memory_space<vmem>>, vector<1x512xf32>
    %c6 = arith.constant 6 : index
    %c0_6 = arith.constant 0 : index
    %6 = vector.load %arg7[%c6, %c0_6] : memref<8x512xf32, #tpu.memory_space<vmem>>, vector<1x512xf32>
    %c7 = arith.constant 7 : index
    %c0_7 = arith.constant 0 : index
    %7 = vector.load %arg7[%c7, %c0_7] : memref<8x512xf32, #tpu.memory_space<vmem>>, vector<1x1xf32>
    %c0_8 = arith.constant 0 : index
    %c0_9 = arith.constant 0 : index
    %8 = vector.load %arg2[%c0_8, %c0_9] : memref<16x128xbf16, #tpu.memory_space<vmem>>, vector<16x128xbf16>
    %c0_10 = arith.constant 0 : index
    %c0_11 = arith.constant 0 : index
    %9 = vector.load %arg3[%c0_10, %c0_11] : memref<128x512xbf16, #tpu.memory_space<vmem>>, vector<128x512xbf16>
    %cst = arith.constant dense<0.000000e+00> : vector<16x512xf32>
    %10 = tpu.matmul %8, %9, %cst {dimension_numbers = #tpu.dot_dimension_numbers<[1], [0], [0], [1], [0, 0, 1, 1], [], []>} : vector<16x128xbf16>, vector<128x512xbf16>, vector<16x512xf32> -> vector<16x512xf32>
    %c0_12 = arith.constant 0 : index
    %c0_13 = arith.constant 0 : index
    %11 = vector.load %arg1[%c0_12, %c0_13] : memref<16x256xf32, #tpu.memory_space<vmem>>, vector<16x256xf32>
    %12 = arith.truncf %11 : vector<16x256xf32> to vector<16x256xbf16>
    %c0_14 = arith.constant 0 : index
    %c0_15 = arith.constant 0 : index
    %13 = vector.load %arg4[%c0_14, %c0_15] : memref<256x512xi8, #tpu.memory_space<vmem>>, vector<256x512xi8>
    %14 = arith.sitofp %13 : vector<256x512xi8> to vector<256x512xbf16>
    %cst_16 = arith.constant dense<0.000000e+00> : vector<16x512xf32>
    %15 = tpu.matmul %12, %14, %cst_16 {dimension_numbers = #tpu.dot_dimension_numbers<[1], [0], [0], [1], [0, 0, 1, 1], [], []>} : vector<16x256xbf16>, vector<256x512xbf16>, vector<16x512xf32> -> vector<16x512xf32>
    %16 = vector.broadcast %3 : vector<1x512xf32> to vector<16x512xf32>
    %17 = arith.mulf %15, %16 : vector<16x512xf32>
    %18 = arith.addf %17, %10 : vector<16x512xf32>
    %19 = vector.broadcast %0 : vector<1x512xf32> to vector<16x512xf32>
    %20 = arith.addf %18, %19 : vector<16x512xf32>
    %cst_17 = arith.constant 2.000000e-01 : f32
    %21 = vector.broadcast %cst_17 : f32 to vector<16x512xf32>
    %22 = arith.mulf %21, %20 : vector<16x512xf32>
    %23 = arith.maximumf %20, %22 : vector<16x512xf32>
    %24 = arith.truncf %23 : vector<16x512xf32> to vector<16x512xbf16>
    %c0_18 = arith.constant 0 : index
    %c0_19 = arith.constant 0 : index
    %25 = vector.load %arg5[%c0_18, %c0_19] : memref<512x512xi8, #tpu.memory_space<vmem>>, vector<512x512xi8>
    %26 = arith.sitofp %25 : vector<512x512xi8> to vector<512x512xbf16>
    %cst_20 = arith.constant dense<0.000000e+00> : vector<16x512xf32>
    %27 = tpu.matmul %24, %26, %cst_20 {dimension_numbers = #tpu.dot_dimension_numbers<[1], [0], [0], [1], [0, 0, 1, 1], [], []>} : vector<16x512xbf16>, vector<512x512xbf16>, vector<16x512xf32> -> vector<16x512xf32>
    %28 = vector.broadcast %4 : vector<1x512xf32> to vector<16x512xf32>
    %29 = arith.mulf %27, %28 : vector<16x512xf32>
    %30 = vector.broadcast %1 : vector<1x512xf32> to vector<16x512xf32>
    %31 = arith.addf %29, %30 : vector<16x512xf32>
    %cst_21 = arith.constant 2.000000e-01 : f32
    %32 = vector.broadcast %cst_21 : f32 to vector<16x512xf32>
    %33 = arith.mulf %32, %31 : vector<16x512xf32>
    %34 = arith.maximumf %31, %33 : vector<16x512xf32>
    %35 = arith.truncf %34 : vector<16x512xf32> to vector<16x512xbf16>
    %c0_22 = arith.constant 0 : index
    %c0_23 = arith.constant 0 : index
    %36 = vector.load %arg6[%c0_22, %c0_23] : memref<512x512xi8, #tpu.memory_space<vmem>>, vector<512x512xi8>
    %37 = arith.sitofp %36 : vector<512x512xi8> to vector<512x512xbf16>
    %cst_24 = arith.constant dense<0.000000e+00> : vector<16x512xf32>
    %38 = tpu.matmul %35, %37, %cst_24 {dimension_numbers = #tpu.dot_dimension_numbers<[1], [0], [0], [1], [0, 0, 1, 1], [], []>} : vector<16x512xbf16>, vector<512x512xbf16>, vector<16x512xf32> -> vector<16x512xf32>
    %39 = vector.broadcast %5 : vector<1x512xf32> to vector<16x512xf32>
    %40 = arith.mulf %38, %39 : vector<16x512xf32>
    %41 = vector.broadcast %2 : vector<1x512xf32> to vector<16x512xf32>
    %42 = arith.addf %40, %41 : vector<16x512xf32>
    %cst_25 = arith.constant 2.000000e-01 : f32
    %43 = vector.broadcast %cst_25 : f32 to vector<16x512xf32>
    %44 = arith.mulf %43, %42 : vector<16x512xf32>
    %45 = arith.maximumf %42, %44 : vector<16x512xf32>
    %46 = vector.broadcast %6 : vector<1x512xf32> to vector<16x512xf32>
    %47 = arith.mulf %45, %46 : vector<16x512xf32>
    %cst_26 = arith.constant dense<0.000000e+00> : vector<16xf32>
    %48 = vector.multi_reduction <add>, %47, %cst_26 [1] : vector<16x512xf32> to vector<16xf32>
    %49 = vector.shape_cast %48 : vector<16xf32> to vector<16x1xf32>
    %50 = vector.broadcast %7 : vector<1x1xf32> to vector<16x1xf32>
    %51 = arith.addf %49, %50 : vector<16x1xf32>
    %52 = arith.negf %51 : vector<16x1xf32>
    %53 = math.exp %52 : vector<16x1xf32>
    %cst_27 = arith.constant 1.000000e+00 : f32
    %54 = vector.broadcast %cst_27 : f32 to vector<16x1xf32>
    %55 = arith.addf %54, %53 : vector<16x1xf32>
    %56 = arith.divf %54, %55 : vector<16x1xf32>
    %57 = vector.shape_cast %56 : vector<16x1xf32> to vector<16x1xf32>
    %58 = vector.broadcast %57 : vector<16x1xf32> to vector<16x128xf32>
    %c0_28 = arith.constant 0 : index
    %c0_29 = arith.constant 0 : index
    %59 = vector.load %arg8[%c0_28, %c0_29] : memref<16x128xf32, #tpu.memory_space<vmem>>, vector<16x128xf32>
    tpu.vector_store %arg8[%c0_28, %c0_29], %58 {strides = array<i32>} : memref<16x128xf32, #tpu.memory_space<vmem>>, vector<16x128xf32>,
    return
  }
  func.func @transform_0(%arg0: i32) -> (i32, i32) {
    %c0_i32 = arith.constant 0 : i32
    %c0_i32_0 = arith.constant 0 : i32
    return %arg0, %c0_i32 : i32, i32
  }
  func.func @transform_1(%arg0: i32) -> (i32, i32) {
    %c0_i32 = arith.constant 0 : i32
    %c0_i32_0 = arith.constant 0 : i32
    return %arg0, %c0_i32 : i32, i32
  }
  func.func @transform_2(%arg0: i32) -> (i32, i32) {
    %c0_i32 = arith.constant 0 : i32
    %c0_i32_0 = arith.constant 0 : i32
    %c0_i32_1 = arith.constant 0 : i32
    return %c0_i32, %c0_i32_0 : i32, i32
  }
  func.func @transform_3(%arg0: i32) -> (i32, i32) {
    %c0_i32 = arith.constant 0 : i32
    %c0_i32_0 = arith.constant 0 : i32
    %c0_i32_1 = arith.constant 0 : i32
    return %c0_i32, %c0_i32_0 : i32, i32
  }
  func.func @transform_4(%arg0: i32) -> (i32, i32) {
    %c0_i32 = arith.constant 0 : i32
    %c0_i32_0 = arith.constant 0 : i32
    %c0_i32_1 = arith.constant 0 : i32
    return %c0_i32, %c0_i32_0 : i32, i32
  }
  func.func @transform_5(%arg0: i32) -> (i32, i32) {
    %c0_i32 = arith.constant 0 : i32
    %c0_i32_0 = arith.constant 0 : i32
    %c0_i32_1 = arith.constant 0 : i32
    return %c0_i32, %c0_i32_0 : i32, i32
  }
  func.func @transform_6(%arg0: i32) -> (i32, i32) {
    %c0_i32 = arith.constant 0 : i32
    %c0_i32_0 = arith.constant 0 : i32
    %c0_i32_1 = arith.constant 0 : i32
    return %c0_i32, %c0_i32_0 : i32, i32
  }
  func.func @transform_7(%arg0: i32) -> (i32, i32) {
    %c0_i32 = arith.constant 0 : i32
    %c0_i32_0 = arith.constant 0 : i32
    return %arg0, %c0_i32 : i32, i32
  }
}

</mosaic_0001>

<llo_original>
// kernel: discriminator_forward.1
$region0: #{discriminator_forward.1}
  #allocation0 [shape = 'u32[]', space=smem, size = 0x4, offset = 0x4, fixed_abs, tag = 'smem constant byte address 0x4 - core index']
  #allocation1 [shape = 'u32[144,128]{1,0:T(1,128)}', space=vmem, size = 0x12000, scoped, tag = 'internal scratch']
  %s0 = inlined_call_operand.vmem [shape: f32[16,256], index: 0, kind: input, shape index: {}]
  %s1 = inlined_call_operand.vmem [shape: bf16[16,128], index: 1, kind: input, shape index: {}]
  %s2 = inlined_call_operand.hbm [shape: bf16[128,512], index: 2, kind: input, shape index: {}]
  %s3 = inlined_call_operand.hbm [shape: s8[256,512], index: 3, kind: input, shape index: {}]
  %s4 = inlined_call_operand.hbm [shape: s8[512,512], index: 4, kind: input, shape index: {}]
  %s5 = inlined_call_operand.hbm [shape: s8[512,512], index: 5, kind: input, shape index: {}]
  %s6 = inlined_call_operand.vmem [shape: f32[8,512], index: 6, kind: input, shape index: {}]
  %s7 = inlined_call_operand.vmem [shape: f32[16,128], index: 7, kind: output, shape index: {}]
  %s8 = sld [smem:[#allocation0]]
  $region54: #{discriminator_forward.1} parent=0
    _
  %s10 = ssub.s32 1, %s8
  %s11 = scalar_select 0, %s10, %s8
  $region1: #{discriminator_forward.1} parent=0
    #allocation2 [shape = 'u8[131072]{0}', space=vmem, size = 0x20000, scoped, tag = 'input window, operand 2, single buffered']
    #allocation3 [shape = 's32[1]{0}', space=sflag, size = 0x4, scoped, tag = 'scoped memory for discriminator_forward.1']
    #allocation4 [shape = 'u8[131072]{0}', space=vmem, size = 0x20000, scoped, tag = 'input window, operand 3, single buffered']
    #allocation5 [shape = 's32[1]{0}', space=sflag, size = 0x4, scoped, tag = 'scoped memory for discriminator_forward.1']
    #allocation6 [shape = 'u8[262144]{0}', space=vmem, size = 0x40000, scoped, tag = 'input window, operand 4, single buffered']
    #allocation7 [shape = 'u8[262144]{0}', space=vmem, size = 0x40000, scoped, tag = 'input window, operand 5, single buffered']
    #allocation8 [shape = 's32[1]{0}', space=sflag, size = 0x4, scoped, tag = 'scoped memory for discriminator_forward.1']
    %12 = vsyncpa [#allocation3], 0
    %13 = vsyncpa [#allocation5], 0
    %14 = vsyncpa [#allocation8], 0
    // Predicated region
    $region2: #{discriminator_forward.1} parent=1 // pred_check
      _
    $region3: #{discriminator_forward.1} parent=1 // pred_check_branch
      %16 = sbr.rel (0) target = $region5
    $region4: #{discriminator_forward.1} parent=1 // pred_region
      _
    $region5: #{discriminator_forward.1} parent=1 // pred_fallthru
      _
    // Predicated region
    $region6: #{discriminator_forward.1} parent=1 // pred_check
      _
    $region7: #{discriminator_forward.1} parent=1 // pred_check_branch
      %18 = sbr.rel (0) target = $region9
    $region8: #{discriminator_forward.1} parent=1 // pred_region
      _
    $region9: #{discriminator_forward.1} parent=1 // pred_fallthru
      _
    // Predicated region
    $region10: #{discriminator_forward.1} parent=1 // pred_check
      _
    $region11: #{discriminator_forward.1} parent=1 // pred_check_branch
      %20 = sbr.rel (0) target = $region13
    $region12: #{discriminator_forward.1} parent=1 // pred_region
      %s22 = ssub.s32 4096, 4096
      %23 = vsyncadd [#allocation3], %s22
      %s24 = sshll.u32 [#allocation2], 4
      %s25 = int_to_ptr.vmem [resolvable:$true] %s24
      %30 = dma.hbm_to_vmem [thread:$0]  %s2, 4096, %s25, [#allocation3], 256, 256, 16
    $region13: #{discriminator_forward.1} parent=1 // pred_fallthru
      _
    // Predicated region
    $region14: #{discriminator_forward.1} parent=1 // pred_check
      _
    $region15: #{discriminator_forward.1} parent=1 // pred_check_branch
      %32 = sbr.rel (0) target = $region17
    $region16: #{discriminator_forward.1} parent=1 // pred_region
      %s34 = ssub.s32 4096, 4096
      %35 = vsyncadd [#allocation5], %s34
      %s36 = sshll.u32 [#allocation4], 4
      %s37 = int_to_ptr.vmem [resolvable:$true] %s36
      %42 = dma.hbm_to_vmem [thread:$0]  %s3, 4096, %s37, [#allocation5], 512, 512, 32
    $region17: #{discriminator_forward.1} parent=1 // pred_fallthru
      _
    // Predicated region
    $region18: #{discriminator_forward.1} parent=1 // pred_check
      _
    $region19: #{discriminator_forward.1} parent=1 // pred_check_branch
      %44 = sbr.rel (0) target = $region21
    $region20: #{discriminator_forward.1} parent=1 // pred_region
      %s46 = ssub.s32 8192, 8192
      %47 = vsyncadd [#allocation5], %s46
      %s48 = sshll.u32 [#allocation6], 4
      %s49 = int_to_ptr.vmem [resolvable:$true] %s48
      %54 = dma.hbm_to_vmem [thread:$0]  %s4, 8192, %s49, [#allocation5], 512, 512, 32
    $region21: #{discriminator_forward.1} parent=1 // pred_fallthru
      _
    // Predicated region
    $region22: #{discriminator_forward.1} parent=1 // pred_check
      _
    $region23: #{discriminator_forward.1} parent=1 // pred_check_branch
      %56 = sbr.rel (0) target = $region25
    $region24: #{discriminator_forward.1} parent=1 // pred_region
      %s58 = ssub.s32 8192, 8192
      %59 = vsyncadd [#allocation8], %s58
      %s60 = sshll.u32 [#allocation7], 4
      %s61 = int_to_ptr.vmem [resolvable:$true] %s60
      %66 = dma.hbm_to_vmem [thread:$0]  %s5, 8192, %s61, [#allocation8], 512, 512, 32
    $region25: #{discriminator_forward.1} parent=1 // pred_fallthru
      _
    // Predicated region
    $region26: #{discriminator_forward.1} parent=1 // pred_check
      _
    $region27: #{discriminator_forward.1} parent=1 // pred_check_branch
      %68 = sbr.rel (0) target = $region29
    $region28: #{discriminator_forward.1} parent=1 // pred_region
      _
    $region29: #{discriminator_forward.1} parent=1 // pred_fallthru
      _
    // Predicated region
    $region30: #{discriminator_forward.1} parent=1 // pred_check
      _
    $region31: #{discriminator_forward.1} parent=1 // pred_check_branch
      %70 = sbr.rel (0) target = $region33
    $region32: #{discriminator_forward.1} parent=1 // pred_region
      %71 = dma.done [#allocation3], 4096
    $region33: #{discriminator_forward.1} parent=1 // pred_fallthru
      _
    // Predicated region
    $region34: #{discriminator_forward.1} parent=1 // pred_check
      _
    $region35: #{discriminator_forward.1} parent=1 // pred_check_branch
      %73 = sbr.rel (0) target = $region37
    $region36: #{discriminator_forward.1} parent=1 // pred_region
      %74 = dma.done [#allocation5], 4096
    $region37: #{discriminator_forward.1} parent=1 // pred_fallthru
      _
    // Predicated region
    $region38: #{discriminator_forward.1} parent=1 // pred_check
      _
    $region39: #{discriminator_forward.1} parent=1 // pred_check_branch
      %76 = sbr.rel (0) target = $region41
    $region40: #{discriminator_forward.1} parent=1 // pred_region
      %77 = dma.done [#allocation5], 8192
    $region41: #{discriminator_forward.1} parent=1 // pred_fallthru
      _
    // Predicated region
    $region42: #{discriminator_forward.1} parent=1 // pred_check
      _
    $region43: #{discriminator_forward.1} parent=1 // pred_check_branch
      %79 = sbr.rel (0) target = $region45
    $region44: #{discriminator_forward.1} parent=1 // pred_region
      %80 = dma.done [#allocation8], 8192
    $region45: #{discriminator_forward.1} parent=1 // pred_fallthru
      _
    %v82 = vld [vmem:[%s6] ss:$8 sm:$0xf]
    %s83 = scalar_lea.vmem %s6, 1
    %v84 = vld [vmem:[%s83] ss:$8 sm:$0xf]
    %s85 = scalar_lea.vmem %s6, 2
    %v86 = vld [vmem:[%s85] ss:$8 sm:$0xf]
    %s87 = scalar_lea.vmem %s6, 3
    %v88 = vld [vmem:[%s87] ss:$8 sm:$0xf]
    %s89 = scalar_lea.vmem %s6, 4
    %v90 = vld [vmem:[%s89] ss:$8 sm:$0xf]
    %s91 = scalar_lea.vmem %s6, 5
    %v92 = vld [vmem:[%s91] ss:$8 sm:$0xf]
    %s93 = scalar_lea.vmem %s6, 6
    %v94 = vld [vmem:[%s93] ss:$8 sm:$0xf]
    %v95 = vld [vmem:[%s6 + $0x7] ss:$0 sm:$0xff]
    %v96 = vld [vmem:[%s1] sm:$0xf]
    %v97 = vld [vmem:[%s1 + $0x4] sm:$0xf]
    %v98 = vld [vmem:[#allocation2] sm:$0xff]
    %v99 = vld [vmem:[#allocation2 + $0x8] sm:$0xff]
    %v100 = vld [vmem:[#allocation2 + $0x10] sm:$0xff]
    %v101 = vld [vmem:[#allocation2 + $0x18] sm:$0xff]
    %v102 = vld [vmem:[#allocation2 + $0x20] sm:$0xff]
    %v103 = vld [vmem:[#allocation2 + $0x28] sm:$0xff]
    %v104 = vld [vmem:[#allocation2 + $0x30] sm:$0xff]
    %v105 = vld [vmem:[#allocation2 + $0x38] sm:$0xff]
    %v106 = vld [vmem:[#allocation2 + $0x40] sm:$0xff]
    %v107 = vld [vmem:[#allocation2 + $0x48] sm:$0xff]
    %v108 = vld [vmem:[#allocation2 + $0x50] sm:$0xff]
    %v109 = vld [vmem:[#allocation2 + $0x58] sm:$0xff]
    %v110 = vld [vmem:[#allocation2 + $0x60] sm:$0xff]
    %v111 = vld [vmem:[#allocation2 + $0x68] sm:$0xff]
    %v112 = vld [vmem:[#allocation2 + $0x70] sm:$0xff]
    %v113 = vld [vmem:[#allocation2 + $0x78] sm:$0xff]
    %v114 = vld [vmem:[#allocation2 + $0x80] sm:$0xff]
    %v115 = vld [vmem:[#allocation2 + $0x88] sm:$0xff]
    %v116 = vld [vmem:[#allocation2 + $0x90] sm:$0xff]
    %v117 = vld [vmem:[#allocation2 + $0x98] sm:$0xff]
    %v118 = vld [vmem:[#allocation2 + $0xa0] sm:$0xff]
    %v119 = vld [vmem:[#allocation2 + $0xa8] sm:$0xff]
    %v120 = vld [vmem:[#allocation2 + $0xb0] sm:$0xff]
    %v121 = vld [vmem:[#allocation2 + $0xb8] sm:$0xff]
    %v122 = vld [vmem:[#allocation2 + $0xc0] sm:$0xff]
    %v123 = vld [vmem:[#allocation2 + $0xc8] sm:$0xff]
    %v124 = vld [vmem:[#allocation2 + $0xd0] sm:$0xff]
    %v125 = vld [vmem:[#allocation2 + $0xd8] sm:$0xff]
    %v126 = vld [vmem:[#allocation2 + $0xe0] sm:$0xff]
    %v127 = vld [vmem:[#allocation2 + $0xe8] sm:$0xff]
    %v128 = vld [vmem:[#allocation2 + $0xf0] sm:$0xff]
    %v129 = vld [vmem:[#allocation2 + $0xf8] sm:$0xff]
    %v132 = vunpack.c.l.b16 %v96
    %v133 = vunpack.c.l.b16 %v97
    %v134 = vpack.c.b16 %v133, %v132
    %v168 = vunpack.c.l.b16 %v98
    %v169 = vunpack.c.h.b16 %v98
    %v170 = vunpack.c.l.b16 %v99
    %v171 = vunpack.c.h.b16 %v99
    %v172 = vunpack.c.l.b16 %v100
    %v173 = vunpack.c.h.b16 %v100
    %v174 = vunpack.c.l.b16 %v101
    %v175 = vunpack.c.h.b16 %v101
    %v176 = vunpack.c.l.b16 %v102
    %v177 = vunpack.c.h.b16 %v102
    %v178 = vunpack.c.l.b16 %v103
    %v179 = vunpack.c.h.b16 %v103
    %v180 = vunpack.c.l.b16 %v104
    %v181 = vunpack.c.h.b16 %v104
    %v182 = vunpack.c.l.b16 %v105
    %v183 = vunpack.c.h.b16 %v105
    %v184 = vunpack.c.l.b16 %v106
    %v185 = vunpack.c.h.b16 %v106
    %v186 = vunpack.c.l.b16 %v107
    %v187 = vunpack.c.h.b16 %v107
    %v188 = vunpack.c.l.b16 %v108
    %v189 = vunpack.c.h.b16 %v108
    %v190 = vunpack.c.l.b16 %v109
    %v191 = vunpack.c.h.b16 %v109
    %v192 = vunpack.c.l.b16 %v110
    %v193 = vunpack.c.h.b16 %v110
    %v194 = vunpack.c.l.b16 %v111
    %v195 = vunpack.c.h.b16 %v111
    %v196 = vunpack.c.l.b16 %v112
    %v197 = vunpack.c.h.b16 %v112
    %v198 = vunpack.c.l.b16 %v113
    %v199 = vunpack.c.h.b16 %v113
    %v200 = vunpack.c.l.b16 %v114
    %v201 = vunpack.c.h.b16 %v114
    %v202 = vunpack.c.l.b16 %v115
    %v203 = vunpack.c.h.b16 %v115
    %v204 = vunpack.c.l.b16 %v116
    %v205 = vunpack.c.h.b16 %v116
    %v206 = vunpack.c.l.b16 %v117
    %v207 = vunpack.c.h.b16 %v117
    %v208 = vunpack.c.l.b16 %v118
    %v209 = vunpack.c.h.b16 %v118
    %v210 = vunpack.c.l.b16 %v119
    %v211 = vunpack.c.h.b16 %v119
    %v212 = vunpack.c.l.b16 %v120
    %v213 = vunpack.c.h.b16 %v120
    %v214 = vunpack.c.l.b16 %v121
    %v215 = vunpack.c.h.b16 %v121
    %v216 = vunpack.c.l.b16 %v122
    %v217 = vunpack.c.h.b16 %v122
    %v218 = vunpack.c.l.b16 %v123
    %v219 = vunpack.c.h.b16 %v123
    %v220 = vunpack.c.l.b16 %v124
    %v221 = vunpack.c.h.b16 %v124
    %v222 = vunpack.c.l.b16 %v125
    %v223 = vunpack.c.h.b16 %v125
    %v224 = vunpack.c.l.b16 %v126
    %v225 = vunpack.c.h.b16 %v126
    %v226 = vunpack.c.l.b16 %v127
    %v227 = vunpack.c.h.b16 %v127
    %v228 = vunpack.c.l.b16 %v128
    %v229 = vunpack.c.h.b16 %v128
    %v230 = vunpack.c.l.b16 %v129
    %v231 = vunpack.c.h.b16 %v129
    %v232 = vpack.c.b16 %v172, %v168
    %v233 = vpack.c.b16 %v173, %v169
    %v234 = vpack.c.b16 %v174, %v170
    %v235 = vpack.c.b16 %v175, %v171
    %v236 = vpack.c.b16 %v180, %v176
    %v237 = vpack.c.b16 %v181, %v177
    %v238 = vpack.c.b16 %v182, %v178
    %v239 = vpack.c.b16 %v183, %v179
    %v240 = vpack.c.b16 %v188, %v184
    %v241 = vpack.c.b16 %v189, %v185
    %v242 = vpack.c.b16 %v190, %v186
    %v243 = vpack.c.b16 %v191, %v187
    %v244 = vpack.c.b16 %v196, %v192
    %v245 = vpack.c.b16 %v197, %v193
    %v246 = vpack.c.b16 %v198, %v194
    %v247 = vpack.c.b16 %v199, %v195
    %v248 = vpack.c.b16 %v204, %v200
    %v249 = vpack.c.b16 %v205, %v201
    %v250 = vpack.c.b16 %v206, %v202
    %v251 = vpack.c.b16 %v207, %v203
    %v252 = vpack.c.b16 %v212, %v208
    %v253 = vpack.c.b16 %v213, %v209
    %v254 = vpack.c.b16 %v214, %v210
    %v255 = vpack.c.b16 %v215, %v211
    %v256 = vpack.c.b16 %v220, %v216
    %v257 = vpack.c.b16 %v221, %v217
    %v258 = vpack.c.b16 %v222, %v218
    %v259 = vpack.c.b16 %v223, %v219
    %v260 = vpack.c.b16 %v228, %v224
    %v261 = vpack.c.b16 %v229, %v225
    %v262 = vpack.c.b16 %v230, %v226
    %v263 = vpack.c.b16 %v231, %v227
    %296 = vmatprep.subr.bf16.mxu0 %v233
    %297 = vmatpush1.bf16.msra.mxu0 %v232
    %298 = vmatprep.subr.bf16.mxu0 %v237
    %299 = vmatpush1.bf16.msra.mxu0 %v236
    %300 = vmatprep.subr.bf16.mxu0 %v241
    %301 = vmatpush1.bf16.msra.mxu0 %v240
    %302 = vmatprep.subr.bf16.mxu0 %v245
    %303 = vmatpush1.bf16.msra.mxu0 %v244
    %304 = vmatprep.subr.bf16.mxu0 %v249
    %305 = vmatpush1.bf16.msra.mxu0 %v248
    %306 = vmatprep.subr.bf16.mxu0 %v253
    %307 = vmatpush1.bf16.msra.mxu0 %v252
    %308 = vmatprep.subr.bf16.mxu0 %v257
    %309 = vmatpush1.bf16.msra.mxu0 %v256
    %310 = vmatprep.subr.bf16.mxu0 %v261
    %311 = vmatpush1.bf16.msra.mxu0 %v260
    %312 = vmatprep.subr.bf16.mxu0 0
    %313 = vmatpush1.bf16.msra.mxu0 0
    %314 = vmatprep.subr.bf16.mxu0 0
    %315 = vmatpush1.bf16.msra.mxu0 0
    %316 = vmatprep.subr.bf16.mxu0 0
    %317 = vmatpush1.bf16.msra.mxu0 0
    %318 = vmatprep.subr.bf16.mxu0 0
    %319 = vmatpush1.bf16.msra.mxu0 0
    %320 = vmatprep.subr.bf16.mxu0 0
    %321 = vmatpush1.bf16.msra.mxu0 0
    %322 = vmatprep.subr.bf16.mxu0 0
    %323 = vmatpush1.bf16.msra.mxu0 0
    %324 = vmatprep.subr.bf16.mxu0 0
    %325 = vmatpush1.bf16.msra.mxu0 0
    %326 = vmatprep.subr.bf16.mxu0 0
    %327 = vmatpush1.bf16.msra.mxu0 0
    %328 = vmatprep.mubr.bf16.mxu0 0
    %329 = vmatmul.mubr.bf16.gmra.mrb[0].mxu0 %v134
    %v330 = vpop.f32.mrb[0].mxu0
    %v331 = vadd.f32 0.0, %v330
    %v332 = vpop.f32.mrb[0].mxu0
    %v333 = vadd.f32 0.0, %v332
    %v334 = vpop.f32.mrb[0].mxu0
    %v335 = vadd.f32 0.0, %v334
    %v336 = vpop.f32.mrb[0].mxu0
    %v337 = vadd.f32 0.0, %v336
    %338 = vdwg.mxu0
    %339 = vmatprep.subr.bf16.mxu0 %v235
    %340 = vmatpush1.bf16.msra.mxu0 %v234
    %341 = vmatprep.subr.bf16.mxu0 %v239
    %342 = vmatpush1.bf16.msra.mxu0 %v238
    %343 = vmatprep.subr.bf16.mxu0 %v243
    %344 = vmatpush1.bf16.msra.mxu0 %v242
    %345 = vmatprep.subr.bf16.mxu0 %v247
    %346 = vmatpush1.bf16.msra.mxu0 %v246
    %347 = vmatprep.subr.bf16.mxu0 %v251
    %348 = vmatpush1.bf16.msra.mxu0 %v250
    %349 = vmatprep.subr.bf16.mxu0 %v255
    %350 = vmatpush1.bf16.msra.mxu0 %v254
    %351 = vmatprep.subr.bf16.mxu0 %v259
    %352 = vmatpush1.bf16.msra.mxu0 %v258
    %353 = vmatprep.subr.bf16.mxu0 %v263
    %354 = vmatpush1.bf16.msra.mxu0 %v262
    %355 = vmatprep.subr.bf16.mxu0 0
    %356 = vmatpush1.bf16.msra.mxu0 0
    %357 = vmatprep.subr.bf16.mxu0 0
    %358 = vmatpush1.bf16.msra.mxu0 0
    %359 = vmatprep.subr.bf16.mxu0 0
    %360 = vmatpush1.bf16.msra.mxu0 0
    %361 = vmatprep.subr.bf16.mxu0 0
    %362 = vmatpush1.bf16.msra.mxu0 0
    %363 = vmatprep.subr.bf16.mxu0 0
    %364 = vmatpush1.bf16.msra.mxu0 0
    %365 = vmatprep.subr.bf16.mxu0 0
    %366 = vmatpush1.bf16.msra.mxu0 0
    %367 = vmatprep.subr.bf16.mxu0 0
    %368 = vmatpush1.bf16.msra.mxu0 0
    %369 = vmatprep.subr.bf16.mxu0 0
    %370 = vmatpush1.bf16.msra.mxu0 0
    %371 = vmatprep.mubr.bf16.mxu0 0
    %372 = vmatmul.mubr.bf16.gmra.mrb[0].mxu0 %v134
    %v373 = vpop.f32.mrb[0].mxu0
    %v374 = vadd.f32 0.0, %v373
    %v375 = vpop.f32.mrb[0].mxu0
    %v376 = vadd.f32 0.0, %v375
    %v377 = vpop.f32.mrb[0].mxu0
    %v378 = vadd.f32 0.0, %v377
    %v379 = vpop.f32.mrb[0].mxu0
    %v380 = vadd.f32 0.0, %v379
    %381 = vdwg.mxu0
    %v382 = vld [vmem:[%s0] sm:$0xff]
    %v383 = vld [vmem:[%s0 + $0x8] sm:$0xff]
    %v384 = vld [vmem:[%s0 + $0x10] sm:$0xff]
    %v385 = vld [vmem:[%s0 + $0x18] sm:$0xff]
    %v386 = vpack.c.bf16 %v384, %v382
    %v387 = vpack.c.bf16 %v385, %v383
    %v388 = vld [vmem:[#allocation4] sm:$0xff]
    %v389 = vld [vmem:[#allocation4 + $0x8] sm:$0xff]
    %v390 = vld [vmem:[#allocation4 + $0x10] sm:$0xff]
    %v391 = vld [vmem:[#allocation4 + $0x18] sm:$0xff]
    %v392 = vld [vmem:[#allocation4 + $0x20] sm:$0xff]
    %v393 = vld [vmem:[#allocation4 + $0x28] sm:$0xff]
    %v394 = vld [vmem:[#allocation4 + $0x30] sm:$0xff]
    %v395 = vld [vmem:[#allocation4 + $0x38] sm:$0xff]
    %v396 = vld [vmem:[#allocation4 + $0x40] sm:$0xff]
    %v397 = vld [vmem:[#allocation4 + $0x48] sm:$0xff]
    %v398 = vld [vmem:[#allocation4 + $0x50] sm:$0xff]
    %v399 = vld [vmem:[#allocation4 + $0x58] sm:$0xff]
    %v400 = vld [vmem:[#allocation4 + $0x60] sm:$0xff]
    %v401 = vld [vmem:[#allocation4 + $0x68] sm:$0xff]
    %v402 = vld [vmem:[#allocation4 + $0x70] sm:$0xff]
    %v403 = vld [vmem:[#allocation4 + $0x78] sm:$0xff]
    %v404 = vld [vmem:[#allocation4 + $0x80] sm:$0xff]
    %v405 = vld [vmem:[#allocation4 + $0x88] sm:$0xff]
    %v406 = vld [vmem:[#allocation4 + $0x90] sm:$0xff]
    %v407 = vld [vmem:[#allocation4 + $0x98] sm:$0xff]
    %v408 = vld [vmem:[#allocation4 + $0xa0] sm:$0xff]
    %v409 = vld [vmem:[#allocation4 + $0xa8] sm:$0xff]
    %v410 = vld [vmem:[#allocation4 + $0xb0] sm:$0xff]
    %v411 = vld [vmem:[#allocation4 + $0xb8] sm:$0xff]
    %v412 = vld [vmem:[#allocation4 + $0xc0] sm:$0xff]
    %v413 = vld [vmem:[#allocation4 + $0xc8] sm:$0xff]
    %v414 = vld [vmem:[#allocation4 + $0xd0] sm:$0xff]
    %v415 = vld [vmem:[#allocation4 + $0xd8] sm:$0xff]
    %v416 = vld [vmem:[#allocation4 + $0xe0] sm:$0xff]
    %v417 = vld [vmem:[#allocation4 + $0xe8] sm:$0xff]
    %v418 = vld [vmem:[#allocation4 + $0xf0] sm:$0xff]
    %v419 = vld [vmem:[#allocation4 + $0xf8] sm:$0xff]
    %v420 = vunpack.c.l.s8.bf16 %v388
    %v421 = vunpack.c.l.s8.bf16 %v389
    %v422 = vunpack.c.l.s8.bf16 %v390
    %v423 = vunpack.c.l.s8.bf16 %v391
    %v424 = vunpack.c.h.s8.bf16 %v388
    %v425 = vunpack.c.h.s8.bf16 %v389
    %v426 = vunpack.c.h.s8.bf16 %v390
    %v427 = vunpack.c.h.s8.bf16 %v391
    %v428 = vunpack.c.l.s8.bf16 %v392
    %v429 = vunpack.c.l.s8.bf16 %v393
    %v430 = vunpack.c.l.s8.bf16 %v394
    %v431 = vunpack.c.l.s8.bf16 %v395
    %v432 = vunpack.c.h.s8.bf16 %v392
    %v433 = vunpack.c.h.s8.bf16 %v393
    %v434 = vunpack.c.h.s8.bf16 %v394
    %v435 = vunpack.c.h.s8.bf16 %v395
    %v436 = vunpack.c.l.s8.bf16 %v396
    %v437 = vunpack.c.l.s8.bf16 %v397
    %v438 = vunpack.c.l.s8.bf16 %v398
    %v439 = vunpack.c.l.s8.bf16 %v399
    %v440 = vunpack.c.h.s8.bf16 %v396
    %v441 = vunpack.c.h.s8.bf16 %v397
    %v442 = vunpack.c.h.s8.bf16 %v398
    %v443 = vunpack.c.h.s8.bf16 %v399
    %v444 = vunpack.c.l.s8.bf16 %v400
    %v445 = vunpack.c.l.s8.bf16 %v401
    %v446 = vunpack.c.l.s8.bf16 %v402
    %v447 = vunpack.c.l.s8.bf16 %v403
    %v448 = vunpack.c.h.s8.bf16 %v400
    %v449 = vunpack.c.h.s8.bf16 %v401
    %v450 = vunpack.c.h.s8.bf16 %v402
    %v451 = vunpack.c.h.s8.bf16 %v403
    %v452 = vunpack.c.l.s8.bf16 %v404
    %v453 = vunpack.c.l.s8.bf16 %v405
    %v454 = vunpack.c.l.s8.bf16 %v406
    %v455 = vunpack.c.l.s8.bf16 %v407
    %v456 = vunpack.c.h.s8.bf16 %v404
    %v457 = vunpack.c.h.s8.bf16 %v405
    %v458 = vunpack.c.h.s8.bf16 %v406
    %v459 = vunpack.c.h.s8.bf16 %v407
    %v460 = vunpack.c.l.s8.bf16 %v408
    %v461 = vunpack.c.l.s8.bf16 %v409
    %v462 = vunpack.c.l.s8.bf16 %v410
    %v463 = vunpack.c.l.s8.bf16 %v411
    %v464 = vunpack.c.h.s8.bf16 %v408
    %v465 = vunpack.c.h.s8.bf16 %v409
    %v466 = vunpack.c.h.s8.bf16 %v410
    %v467 = vunpack.c.h.s8.bf16 %v411
    %v468 = vunpack.c.l.s8.bf16 %v412
    %v469 = vunpack.c.l.s8.bf16 %v413
    %v470 = vunpack.c.l.s8.bf16 %v414
    %v471 = vunpack.c.l.s8.bf16 %v415
    %v472 = vunpack.c.h.s8.bf16 %v412
    %v473 = vunpack.c.h.s8.bf16 %v413
    %v474 = vunpack.c.h.s8.bf16 %v414
    %v475 = vunpack.c.h.s8.bf16 %v415
    %v476 = vunpack.c.l.s8.bf16 %v416
    %v477 = vunpack.c.l.s8.bf16 %v417
    %v478 = vunpack.c.l.s8.bf16 %v418
    %v479 = vunpack.c.l.s8.bf16 %v419
    %v480 = vunpack.c.h.s8.bf16 %v416
    %v481 = vunpack.c.h.s8.bf16 %v417
    %v482 = vunpack.c.h.s8.bf16 %v418
    %v483 = vunpack.c.h.s8.bf16 %v419
    %484 = vmatprep.subr.bf16.mxu0 %v421
    %485 = vmatpush1.bf16.msra.mxu0 %v420
    %486 = vmatprep.subr.bf16.mxu0 %v425
    %487 = vmatpush1.bf16.msra.mxu0 %v424
    %488 = vmatprep.subr.bf16.mxu0 %v429
    %489 = vmatpush1.bf16.msra.mxu0 %v428
    %490 = vmatprep.subr.bf16.mxu0 %v433
    %491 = vmatpush1.bf16.msra.mxu0 %v432
    %492 = vmatprep.subr.bf16.mxu0 %v437
    %493 = vmatpush1.bf16.msra.mxu0 %v436
    %494 = vmatprep.subr.bf16.mxu0 %v441
    %495 = vmatpush1.bf16.msra.mxu0 %v440
    %496 = vmatprep.subr.bf16.mxu0 %v445
    %497 = vmatpush1.bf16.msra.mxu0 %v444
    %498 = vmatprep.subr.bf16.mxu0 %v449
    %499 = vmatpush1.bf16.msra.mxu0 %v448
    %500 = vmatprep.subr.bf16.mxu0 %v453
    %501 = vmatpush1.bf16.msra.mxu0 %v452
    %502 = vmatprep.subr.bf16.mxu0 %v457
    %503 = vmatpush1.bf16.msra.mxu0 %v456
    %504 = vmatprep.subr.bf16.mxu0 %v461
    %505 = vmatpush1.bf16.msra.mxu0 %v460
    %506 = vmatprep.subr.bf16.mxu0 %v465
    %507 = vmatpush1.bf16.msra.mxu0 %v464
    %508 = vmatprep.subr.bf16.mxu0 %v469
    %509 = vmatpush1.bf16.msra.mxu0 %v468
    %510 = vmatprep.subr.bf16.mxu0 %v473
    %511 = vmatpush1.bf16.msra.mxu0 %v472
    %512 = vmatprep.subr.bf16.mxu0 %v477
    %513 = vmatpush1.bf16.msra.mxu0 %v476
    %514 = vmatprep.subr.bf16.mxu0 %v481
    %515 = vmatpush1.bf16.msra.mxu0 %v480
    %516 = vmatprep.mubr.bf16.mxu0 %v387
    %517 = vmatmul.mubr.bf16.gmra.mrb[0].mxu0 %v386
    %v518 = vpop.f32.mrb[0].mxu0
    %v519 = vadd.f32 0.0, %v518
    %v520 = vpop.f32.mrb[0].mxu0
    %v521 = vadd.f32 0.0, %v520
    %v522 = vpop.f32.mrb[0].mxu0
    %v523 = vadd.f32 0.0, %v522
    %v524 = vpop.f32.mrb[0].mxu0
    %v525 = vadd.f32 0.0, %v524
    %526 = vdwg.mxu0
    %527 = vmatprep.subr.bf16.mxu0 %v423
    %528 = vmatpush1.bf16.msra.mxu0 %v422
    %529 = vmatprep.subr.bf16.mxu0 %v427
    %530 = vmatpush1.bf16.msra.mxu0 %v426
    %531 = vmatprep.subr.bf16.mxu0 %v431
    %532 = vmatpush1.bf16.msra.mxu0 %v430
    %533 = vmatprep.subr.bf16.mxu0 %v435
    %534 = vmatpush1.bf16.msra.mxu0 %v434
    %535 = vmatprep.subr.bf16.mxu0 %v439
    %536 = vmatpush1.bf16.msra.mxu0 %v438
    %537 = vmatprep.subr.bf16.mxu0 %v443
    %538 = vmatpush1.bf16.msra.mxu0 %v442
    %539 = vmatprep.subr.bf16.mxu0 %v447
    %540 = vmatpush1.bf16.msra.mxu0 %v446
    %541 = vmatprep.subr.bf16.mxu0 %v451
    %542 = vmatpush1.bf16.msra.mxu0 %v450
    %543 = vmatprep.subr.bf16.mxu0 %v455
    %544 = vmatpush1.bf16.msra.mxu0 %v454
    %545 = vmatprep.subr.bf16.mxu0 %v459
    %546 = vmatpush1.bf16.msra.mxu0 %v458
    %547 = vmatprep.subr.bf16.mxu0 %v463
    %548 = vmatpush1.bf16.msra.mxu0 %v462
    %549 = vmatprep.subr.bf16.mxu0 %v467
    %550 = vmatpush1.bf16.msra.mxu0 %v466
    %551 = vmatprep.subr.bf16.mxu0 %v471
    %552 = vmatpush1.bf16.msra.mxu0 %v470
    %553 = vmatprep.subr.bf16.mxu0 %v475
    %554 = vmatpush1.bf16.msra.mxu0 %v474
    %555 = vmatprep.subr.bf16.mxu0 %v479
    %556 = vmatpush1.bf16.msra.mxu0 %v478
    %557 = vmatprep.subr.bf16.mxu0 %v483
    %558 = vmatpush1.bf16.msra.mxu0 %v482
    %559 = vmatprep.mubr.bf16.mxu0 %v387
    %560 = vmatmul.mubr.bf16.gmra.mrb[0].mxu0 %v386
    %v561 = vpop.f32.mrb[0].mxu0
    %v562 = vadd.f32 0.0, %v561
    %v563 = vpop.f32.mrb[0].mxu0
    %v564 = vadd.f32 0.0, %v563
    %v565 = vpop.f32.mrb[0].mxu0
    %v566 = vadd.f32 0.0, %v565
    %v567 = vpop.f32.mrb[0].mxu0
    %v568 = vadd.f32 0.0, %v567
    %569 = vdwg.mxu0
    %v571 = vlaneseq
    %v572 = vshrl.u32 %v571, 7
    %v573 = vsub.s32 0, %v572
    %v574 = vrot.slane %v88, %v573
    %v575 = vlaneseq
    %v576 = vshrl.u32 %v575, 7
    %v577 = vsub.s32 1, %v576
    %v578 = vrot.slane %v88, %v577
    %v579 = vlaneseq
    %v580 = vshrl.u32 %v579, 7
    %v581 = vsub.s32 2, %v580
    %v582 = vrot.slane %v88, %v581
    %v583 = vlaneseq
    %v584 = vshrl.u32 %v583, 7
    %v585 = vsub.s32 3, %v584
    %v586 = vrot.slane %v88, %v585
    %v591 = vmul.f32 %v519, %v574
    %v592 = vmul.f32 %v521, %v578
    %v593 = vmul.f32 %v562, %v582
    %v594 = vmul.f32 %v564, %v586
    %v595 = vmul.f32 %v523, %v574
    %v596 = vmul.f32 %v525, %v578
    %v597 = vmul.f32 %v566, %v582
    %v598 = vmul.f32 %v568, %v586
    %v599 = vadd.f32 %v591, %v331
    %v600 = vadd.f32 %v592, %v333
    %v601 = vadd.f32 %v593, %v374
    %v602 = vadd.f32 %v594, %v376
    %v603 = vadd.f32 %v595, %v335
    %v604 = vadd.f32 %v596, %v337
    %v605 = vadd.f32 %v597, %v378
    %v606 = vadd.f32 %v598, %v380
    %v608 = vlaneseq
    %v609 = vshrl.u32 %v608, 7
    %v610 = vsub.s32 0, %v609
    %v611 = vrot.slane %v82, %v610
    %v612 = vlaneseq
    %v613 = vshrl.u32 %v612, 7
    %v614 = vsub.s32 1, %v613
    %v615 = vrot.slane %v82, %v614
    %v616 = vlaneseq
    %v617 = vshrl.u32 %v616, 7
    %v618 = vsub.s32 2, %v617
    %v619 = vrot.slane %v82, %v618
    %v620 = vlaneseq
    %v621 = vshrl.u32 %v620, 7
    %v622 = vsub.s32 3, %v621
    %v623 = vrot.slane %v82, %v622
    %v628 = vadd.f32 %v599, %v611
    %v629 = vadd.f32 %v600, %v615
    %v630 = vadd.f32 %v601, %v619
    %v631 = vadd.f32 %v602, %v623
    %v632 = vadd.f32 %v603, %v611
    %v633 = vadd.f32 %v604, %v615
    %v634 = vadd.f32 %v605, %v619
    %v635 = vadd.f32 %v606, %v623
    %v636 = vmul.f32 %v628, 0.2
    %v637 = vmul.f32 %v629, 0.2
    %v638 = vmul.f32 %v630, 0.2
    %v639 = vmul.f32 %v631, 0.2
    %v640 = vmul.f32 %v632, 0.2
    %v641 = vmul.f32 %v633, 0.2
    %v642 = vmul.f32 %v634, 0.2
    %v643 = vmul.f32 %v635, 0.2
    %v644 = vmax.f32 %v628, %v636
    %v645 = vmax.f32 %v629, %v637
    %v646 = vmax.f32 %v630, %v638
    %v647 = vmax.f32 %v631, %v639
    %v648 = vmax.f32 %v632, %v640
    %v649 = vmax.f32 %v633, %v641
    %v650 = vmax.f32 %v634, %v642
    %v651 = vmax.f32 %v635, %v643
    %v652 = vpack.c.bf16 %v648, %v644
    %v653 = vpack.c.bf16 %v649, %v645
    %v654 = vpack.c.bf16 %v650, %v646
    %v655 = vpack.c.bf16 %v651, %v647
    %v656 = vld [vmem:[#allocation6] sm:$0xff]
    %v657 = vld [vmem:[#allocation6 + $0x8] sm:$0xff]
    %v658 = vld [vmem:[#allocation6 + $0x10] sm:$0xff]
    %v659 = vld [vmem:[#allocation6 + $0x18] sm:$0xff]
    %v660 = vld [vmem:[#allocation6 + $0x20] sm:$0xff]
    %v661 = vld [vmem:[#allocation6 + $0x28] sm:$0xff]
    %v662 = vld [vmem:[#allocation6 + $0x30] sm:$0xff]
    %v663 = vld [vmem:[#allocation6 + $0x38] sm:$0xff]
    %v664 = vld [vmem:[#allocation6 + $0x40] sm:$0xff]
    %v665 = vld [vmem:[#allocation6 + $0x48] sm:$0xff]
    %v666 = vld [vmem:[#allocation6 + $0x50] sm:$0xff]
    %v667 = vld [vmem:[#allocation6 + $0x58] sm:$0xff]
    %v668 = vld [vmem:[#allocation6 + $0x60] sm:$0xff]
    %v669 = vld [vmem:[#allocation6 + $0x68] sm:$0xff]
    %v670 = vld [vmem:[#allocation6 + $0x70] sm:$0xff]
    %v671 = vld [vmem:[#allocation6 + $0x78] sm:$0xff]
    %v672 = vld [vmem:[#allocation6 + $0x80] sm:$0xff]
    %v673 = vld [vmem:[#allocation6 + $0x88] sm:$0xff]
    %v674 = vld [vmem:[#allocation6 + $0x90] sm:$0xff]
    %v675 = vld [vmem:[#allocation6 + $0x98] sm:$0xff]
    %v676 = vld [vmem:[#allocation6 + $0xa0] sm:$0xff]
    %v677 = vld [vmem:[#allocation6 + $0xa8] sm:$0xff]
    %v678 = vld [vmem:[#allocation6 + $0xb0] sm:$0xff]
    %v679 = vld [vmem:[#allocation6 + $0xb8] sm:$0xff]
    %v680 = vld [vmem:[#allocation6 + $0xc0] sm:$0xff]
    %v681 = vld [vmem:[#allocation6 + $0xc8] sm:$0xff]
    %v682 = vld [vmem:[#allocation6 + $0xd0] sm:$0xff]
    %v683 = vld [vmem:[#allocation6 + $0xd8] sm:$0xff]
    %v684 = vld [vmem:[#allocation6 + $0xe0] sm:$0xff]
    %v685 = vld [vmem:[#allocation6 + $0xe8] sm:$0xff]
    %v686 = vld [vmem:[#allocation6 + $0xf0] sm:$0xff]
    %v687 = vld [vmem:[#allocation6 + $0xf8] sm:$0xff]
    %v688 = vld [vmem:[#allocation6 + $0x100] sm:$0xff]
    %v689 = vld [vmem:[#allocation6 + $0x108] sm:$0xff]
    %v690 = vld [vmem:[#allocation6 + $0x110] sm:$0xff]
    %v691 = vld [vmem:[#allocation6 + $0x118] sm:$0xff]
    %v692 = vld [vmem:[#allocation6 + $0x120] sm:$0xff]
    %v693 = vld [vmem:[#allocation6 + $0x128] sm:$0xff]
    %v694 = vld [vmem:[#allocation6 + $0x130] sm:$0xff]
    %v695 = vld [vmem:[#allocation6 + $0x138] sm:$0xff]
    %v696 = vld [vmem:[#allocation6 + $0x140] sm:$0xff]
    %v697 = vld [vmem:[#allocation6 + $0x148] sm:$0xff]
    %v698 = vld [vmem:[#allocation6 + $0x150] sm:$0xff]
    %v699 = vld [vmem:[#allocation6 + $0x158] sm:$0xff]
    %v700 = vld [vmem:[#allocation6 + $0x160] sm:$0xff]
    %v701 = vld [vmem:[#allocation6 + $0x168] sm:$0xff]
    %v702 = vld [vmem:[#allocation6 + $0x170] sm:$0xff]
    %v703 = vld [vmem:[#allocation6 + $0x178] sm:$0xff]
    %v704 = vld [vmem:[#allocation6 + $0x180] sm:$0xff]
    %v705 = vld [vmem:[#allocation6 + $0x188] sm:$0xff]
    %v706 = vld [vmem:[#allocation6 + $0x190] sm:$0xff]
    %v707 = vld [vmem:[#allocation6 + $0x198] sm:$0xff]
    %v708 = vld [vmem:[#allocation6 + $0x1a0] sm:$0xff]
    %v709 = vld [vmem:[#allocation6 + $0x1a8] sm:$0xff]
    %v710 = vld [vmem:[#allocation6 + $0x1b0] sm:$0xff]
    %v711 = vld [vmem:[#allocation6 + $0x1b8] sm:$0xff]
    %v712 = vld [vmem:[#allocation6 + $0x1c0] sm:$0xff]
    %v713 = vld [vmem:[#allocation6 + $0x1c8] sm:$0xff]
    %v714 = vld [vmem:[#allocation6 + $0x1d0] sm:$0xff]
    %v715 = vld [vmem:[#allocation6 + $0x1d8] sm:$0xff]
    %v716 = vld [vmem:[#allocation6 + $0x1e0] sm:$0xff]
    %v717 = vld [vmem:[#allocation6 + $0x1e8] sm:$0xff]
    %v718 = vld [vmem:[#allocation6 + $0x1f0] sm:$0xff]
    %v719 = vld [vmem:[#allocation6 + $0x1f8] sm:$0xff]
    %v720 = vunpack.c.l.s8.bf16 %v656
    %v721 = vunpack.c.l.s8.bf16 %v657
    %v722 = vunpack.c.l.s8.bf16 %v658
    %v723 = vunpack.c.l.s8.bf16 %v659
    %v724 = vunpack.c.h.s8.bf16 %v656
    %v725 = vunpack.c.h.s8.bf16 %v657
    %v726 = vunpack.c.h.s8.bf16 %v658
    %v727 = vunpack.c.h.s8.bf16 %v659
    %v728 = vunpack.c.l.s8.bf16 %v660
    %v729 = vunpack.c.l.s8.bf16 %v661
    %v730 = vunpack.c.l.s8.bf16 %v662
    %v731 = vunpack.c.l.s8.bf16 %v663
    %v732 = vunpack.c.h.s8.bf16 %v660
    %v733 = vunpack.c.h.s8.bf16 %v661
    %v734 = vunpack.c.h.s8.bf16 %v662
    %v735 = vunpack.c.h.s8.bf16 %v663
    %v736 = vunpack.c.l.s8.bf16 %v664
    %v737 = vunpack.c.l.s8.bf16 %v665
    %v738 = vunpack.c.l.s8.bf16 %v666
    %v739 = vunpack.c.l.s8.bf16 %v667
    %v740 = vunpack.c.h.s8.bf16 %v664
    %v741 = vunpack.c.h.s8.bf16 %v665
    %v742 = vunpack.c.h.s8.bf16 %v666
    %v743 = vunpack.c.h.s8.bf16 %v667
    %v744 = vunpack.c.l.s8.bf16 %v668
    %v745 = vunpack.c.l.s8.bf16 %v669
    %v746 = vunpack.c.l.s8.bf16 %v670
    %v747 = vunpack.c.l.s8.bf16 %v671
    %v748 = vunpack.c.h.s8.bf16 %v668
    %v749 = vunpack.c.h.s8.bf16 %v669
    %v750 = vunpack.c.h.s8.bf16 %v670
    %v751 = vunpack.c.h.s8.bf16 %v671
    %v752 = vunpack.c.l.s8.bf16 %v672
    %v753 = vunpack.c.l.s8.bf16 %v673
    %v754 = vunpack.c.l.s8.bf16 %v674
    %v755 = vunpack.c.l.s8.bf16 %v675
    %v756 = vunpack.c.h.s8.bf16 %v672
    %v757 = vunpack.c.h.s8.bf16 %v673
    %v758 = vunpack.c.h.s8.bf16 %v674
    %v759 = vunpack.c.h.s8.bf16 %v675
    %v760 = vunpack.c.l.s8.bf16 %v676
    %v761 = vunpack.c.l.s8.bf16 %v677
    %v762 = vunpack.c.l.s8.bf16 %v678
    %v763 = vunpack.c.l.s8.bf16 %v679
    %v764 = vunpack.c.h.s8.bf16 %v676
    %v765 = vunpack.c.h.s8.bf16 %v677
    %v766 = vunpack.c.h.s8.bf16 %v678
    %v767 = vunpack.c.h.s8.bf16 %v679
    %v768 = vunpack.c.l.s8.bf16 %v680
    %v769 = vunpack.c.l.s8.bf16 %v681
    %v770 = vunpack.c.l.s8.bf16 %v682
    %v771 = vunpack.c.l.s8.bf16 %v683
    %v772 = vunpack.c.h.s8.bf16 %v680
    %v773 = vunpack.c.h.s8.bf16 %v681
    %v774 = vunpack.c.h.s8.bf16 %v682
    %v775 = vunpack.c.h.s8.bf16 %v683
    %v776 = vunpack.c.l.s8.bf16 %v684
    %v777 = vunpack.c.l.s8.bf16 %v685
    %v778 = vunpack.c.l.s8.bf16 %v686
    %v779 = vunpack.c.l.s8.bf16 %v687
    %v780 = vunpack.c.h.s8.bf16 %v684
    %v781 = vunpack.c.h.s8.bf16 %v685
    %v782 = vunpack.c.h.s8.bf16 %v686
    %v783 = vunpack.c.h.s8.bf16 %v687
    %v784 = vunpack.c.l.s8.bf16 %v688
    %v785 = vunpack.c.l.s8.bf16 %v689
    %v786 = vunpack.c.l.s8.bf16 %v690
    %v787 = vunpack.c.l.s8.bf16 %v691
    %v788 = vunpack.c.h.s8.bf16 %v688
    %v789 = vunpack.c.h.s8.bf16 %v689
    %v790 = vunpack.c.h.s8.bf16 %v690
    %v791 = vunpack.c.h.s8.bf16 %v691
    %v792 = vunpack.c.l.s8.bf16 %v692
    %v793 = vunpack.c.l.s8.bf16 %v693
    %v794 = vunpack.c.l.s8.bf16 %v694
    %v795 = vunpack.c.l.s8.bf16 %v695
    %v796 = vunpack.c.h.s8.bf16 %v692
    %v797 = vunpack.c.h.s8.bf16 %v693
    %v798 = vunpack.c.h.s8.bf16 %v694
    %v799 = vunpack.c.h.s8.bf16 %v695
    %v800 = vunpack.c.l.s8.bf16 %v696
    %v801 = vunpack.c.l.s8.bf16 %v697
    %v802 = vunpack.c.l.s8.bf16 %v698
    %v803 = vunpack.c.l.s8.bf16 %v699
    %v804 = vunpack.c.h.s8.bf16 %v696
    %v805 = vunpack.c.h.s8.bf16 %v697
    %v806 = vunpack.c.h.s8.bf16 %v698
    %v807 = vunpack.c.h.s8.bf16 %v699
    %v808 = vunpack.c.l.s8.bf16 %v700
    %v809 = vunpack.c.l.s8.bf16 %v701
    %v810 = vunpack.c.l.s8.bf16 %v702
    %v811 = vunpack.c.l.s8.bf16 %v703
    %v812 = vunpack.c.h.s8.bf16 %v700
    %v813 = vunpack.c.h.s8.bf16 %v701
    %v814 = vunpack.c.h.s8.bf16 %v702
    %v815 = vunpack.c.h.s8.bf16 %v703
    %v816 = vunpack.c.l.s8.bf16 %v704
    %v817 = vunpack.c.l.s8.bf16 %v705
    %v818 = vunpack.c.l.s8.bf16 %v706
    %v819 = vunpack.c.l.s8.bf16 %v707
    %v820 = vunpack.c.h.s8.bf16 %v704
    %v821 = vunpack.c.h.s8.bf16 %v705
    %v822 = vunpack.c.h.s8.bf16 %v706
    %v823 = vunpack.c.h.s8.bf16 %v707
    %v824 = vunpack.c.l.s8.bf16 %v708
    %v825 = vunpack.c.l.s8.bf16 %v709
    %v826 = vunpack.c.l.s8.bf16 %v710
    %v827 = vunpack.c.l.s8.bf16 %v711
    %v828 = vunpack.c.h.s8.bf16 %v708
    %v829 = vunpack.c.h.s8.bf16 %v709
    %v830 = vunpack.c.h.s8.bf16 %v710
    %v831 = vunpack.c.h.s8.bf16 %v711
    %v832 = vunpack.c.l.s8.bf16 %v712
    %v833 = vunpack.c.l.s8.bf16 %v713
    %v834 = vunpack.c.l.s8.bf16 %v714
    %v835 = vunpack.c.l.s8.bf16 %v715
    %v836 = vunpack.c.h.s8.bf16 %v712
    %v837 = vunpack.c.h.s8.bf16 %v713
    %v838 = vunpack.c.h.s8.bf16 %v714
    %v839 = vunpack.c.h.s8.bf16 %v715
    %v840 = vunpack.c.l.s8.bf16 %v716
    %v841 = vunpack.c.l.s8.bf16 %v717
    %v842 = vunpack.c.l.s8.bf16 %v718
    %v843 = vunpack.c.l.s8.bf16 %v719
    %v844 = vunpack.c.h.s8.bf16 %v716
    %v845 = vunpack.c.h.s8.bf16 %v717
    %v846 = vunpack.c.h.s8.bf16 %v718
    %v847 = vunpack.c.h.s8.bf16 %v719
    %848 = vmatprep.subr.bf16.mxu0 %v721
    %849 = vmatpush1.bf16.msra.mxu0 %v720
    %850 = vmatprep.subr.bf16.mxu0 %v725
    %851 = vmatpush1.bf16.msra.mxu0 %v724
    %852 = vmatprep.subr.bf16.mxu0 %v729
    %853 = vmatpush1.bf16.msra.mxu0 %v728
    %854 = vmatprep.subr.bf16.mxu0 %v733
    %855 = vmatpush1.bf16.msra.mxu0 %v732
    %856 = vmatprep.subr.bf16.mxu0 %v737
    %857 = vmatpush1.bf16.msra.mxu0 %v736
    %858 = vmatprep.subr.bf16.mxu0 %v741
    %859 = vmatpush1.bf16.msra.mxu0 %v740
    %860 = vmatprep.subr.bf16.mxu0 %v745
    %861 = vmatpush1.bf16.msra.mxu0 %v744
    %862 = vmatprep.subr.bf16.mxu0 %v749
    %863 = vmatpush1.bf16.msra.mxu0 %v748
    %864 = vmatprep.subr.bf16.mxu0 %v753
    %865 = vmatpush1.bf16.msra.mxu0 %v752
    %866 = vmatprep.subr.bf16.mxu0 %v757
    %867 = vmatpush1.bf16.msra.mxu0 %v756
    %868 = vmatprep.subr.bf16.mxu0 %v761
    %869 = vmatpush1.bf16.msra.mxu0 %v760
    %870 = vmatprep.subr.bf16.mxu0 %v765
    %871 = vmatpush1.bf16.msra.mxu0 %v764
    %872 = vmatprep.subr.bf16.mxu0 %v769
    %873 = vmatpush1.bf16.msra.mxu0 %v768
    %874 = vmatprep.subr.bf16.mxu0 %v773
    %875 = vmatpush1.bf16.msra.mxu0 %v772
    %876 = vmatprep.subr.bf16.mxu0 %v777
    %877 = vmatpush1.bf16.msra.mxu0 %v776
    %878 = vmatprep.subr.bf16.mxu0 %v781
    %879 = vmatpush1.bf16.msra.mxu0 %v780
    %880 = vmatprep.mubr.bf16.mxu0 %v653
    %881 = vmatmul.mubr.bf16.gmra.mrb[0].mxu0 %v652
    %v882 = vpop.f32.mrb[0].mxu0
    %v883 = vadd.f32 0.0, %v882
    %v884 = vpop.f32.mrb[0].mxu0
    %v885 = vadd.f32 0.0, %v884
    %v886 = vpop.f32.mrb[0].mxu0
    %v887 = vadd.f32 0.0, %v886
    %v888 = vpop.f32.mrb[0].mxu0
    %v889 = vadd.f32 0.0, %v888
    %890 = vdwg.mxu0
    %891 = vmatprep.subr.bf16.mxu0 %v785
    %892 = vmatpush1.bf16.msra.mxu0 %v784
    %893 = vmatprep.subr.bf16.mxu0 %v789
    %894 = vmatpush1.bf16.msra.mxu0 %v788
    %895 = vmatprep.subr.bf16.mxu0 %v793
    %896 = vmatpush1.bf16.msra.mxu0 %v792
    %897 = vmatprep.subr.bf16.mxu0 %v797
    %898 = vmatpush1.bf16.msra.mxu0 %v796
    %899 = vmatprep.subr.bf16.mxu0 %v801
    %900 = vmatpush1.bf16.msra.mxu0 %v800
    %901 = vmatprep.subr.bf16.mxu0 %v805
    %902 = vmatpush1.bf16.msra.mxu0 %v804
    %903 = vmatprep.subr.bf16.mxu0 %v809
    %904 = vmatpush1.bf16.msra.mxu0 %v808
    %905 = vmatprep.subr.bf16.mxu0 %v813
    %906 = vmatpush1.bf16.msra.mxu0 %v812
    %907 = vmatprep.subr.bf16.mxu0 %v817
    %908 = vmatpush1.bf16.msra.mxu0 %v816
    %909 = vmatprep.subr.bf16.mxu0 %v821
    %910 = vmatpush1.bf16.msra.mxu0 %v820
    %911 = vmatprep.subr.bf16.mxu0 %v825
    %912 = vmatpush1.bf16.msra.mxu0 %v824
    %913 = vmatprep.subr.bf16.mxu0 %v829
    %914 = vmatpush1.bf16.msra.mxu0 %v828
    %915 = vmatprep.subr.bf16.mxu0 %v833
    %916 = vmatpush1.bf16.msra.mxu0 %v832
    %917 = vmatprep.subr.bf16.mxu0 %v837
    %918 = vmatpush1.bf16.msra.mxu0 %v836
    %919 = vmatprep.subr.bf16.mxu0 %v841
    %920 = vmatpush1.bf16.msra.mxu0 %v840
    %921 = vmatprep.subr.bf16.mxu0 %v845
    %922 = vmatpush1.bf16.msra.mxu0 %v844
    %923 = vmatprep.mubr.bf16.mxu0 %v655
    %924 = vmatmul.mubr.bf16.gmra.mrb[0].mxu0 %v654
    %v925 = vpop.f32.mrb[0].mxu0
    %v926 = vadd.f32 %v883, %v925
    %v927 = vpop.f32.mrb[0].mxu0
    %v928 = vadd.f32 %v885, %v927
    %v929 = vpop.f32.mrb[0].mxu0
    %v930 = vadd.f32 %v887, %v929
    %v931 = vpop.f32.mrb[0].mxu0
    %v932 = vadd.f32 %v889, %v931
    %933 = vdwg.mxu0
    %934 = vmatprep.subr.bf16.mxu0 %v723
    %935 = vmatpush1.bf16.msra.mxu0 %v722
    %936 = vmatprep.subr.bf16.mxu0 %v727
    %937 = vmatpush1.bf16.msra.mxu0 %v726
    %938 = vmatprep.subr.bf16.mxu0 %v731
    %939 = vmatpush1.bf16.msra.mxu0 %v730
    %940 = vmatprep.subr.bf16.mxu0 %v735
    %941 = vmatpush1.bf16.msra.mxu0 %v734
    %942 = vmatprep.subr.bf16.mxu0 %v739
    %943 = vmatpush1.bf16.msra.mxu0 %v738
    %944 = vmatprep.subr.bf16.mxu0 %v743
    %945 = vmatpush1.bf16.msra.mxu0 %v742
    %946 = vmatprep.subr.bf16.mxu0 %v747
    %947 = vmatpush1.bf16.msra.mxu0 %v746
    %948 = vmatprep.subr.bf16.mxu0 %v751
    %949 = vmatpush1.bf16.msra.mxu0 %v750
    %950 = vmatprep.subr.bf16.mxu0 %v755
    %951 = vmatpush1.bf16.msra.mxu0 %v754
    %952 = vmatprep.subr.bf16.mxu0 %v759
    %953 = vmatpush1.bf16.msra.mxu0 %v758
    %954 = vmatprep.subr.bf16.mxu0 %v763
    %955 = vmatpush1.bf16.msra.mxu0 %v762
    %956 = vmatprep.subr.bf16.mxu0 %v767
    %957 = vmatpush1.bf16.msra.mxu0 %v766
    %958 = vmatprep.subr.bf16.mxu0 %v771
    %959 = vmatpush1.bf16.msra.mxu0 %v770
    %960 = vmatprep.subr.bf16.mxu0 %v775
    %961 = vmatpush1.bf16.msra.mxu0 %v774
    %962 = vmatprep.subr.bf16.mxu0 %v779
    %963 = vmatpush1.bf16.msra.mxu0 %v778
    %964 = vmatprep.subr.bf16.mxu0 %v783
    %965 = vmatpush1.bf16.msra.mxu0 %v782
    %966 = vmatprep.mubr.bf16.mxu0 %v653
    %967 = vmatmul.mubr.bf16.gmra.mrb[0].mxu0 %v652
    %v968 = vpop.f32.mrb[0].mxu0
    %v969 = vadd.f32 0.0, %v968
    %v970 = vpop.f32.mrb[0].mxu0
    %v971 = vadd.f32 0.0, %v970
    %v972 = vpop.f32.mrb[0].mxu0
    %v973 = vadd.f32 0.0, %v972
    %v974 = vpop.f32.mrb[0].mxu0
    %v975 = vadd.f32 0.0, %v974
    %976 = vdwg.mxu0
    %977 = vmatprep.subr.bf16.mxu0 %v787
    %978 = vmatpush1.bf16.msra.mxu0 %v786
    %979 = vmatprep.subr.bf16.mxu0 %v791
    %980 = vmatpush1.bf16.msra.mxu0 %v790
    %981 = vmatprep.subr.bf16.mxu0 %v795
    %982 = vmatpush1.bf16.msra.mxu0 %v794
    %983 = vmatprep.subr.bf16.mxu0 %v799
    %984 = vmatpush1.bf16.msra.mxu0 %v798
    %985 = vmatprep.subr.bf16.mxu0 %v803
    %986 = vmatpush1.bf16.msra.mxu0 %v802
    %987 = vmatprep.subr.bf16.mxu0 %v807
    %988 = vmatpush1.bf16.msra.mxu0 %v806
    %989 = vmatprep.subr.bf16.mxu0 %v811
    %990 = vmatpush1.bf16.msra.mxu0 %v810
    %991 = vmatprep.subr.bf16.mxu0 %v815
    %992 = vmatpush1.bf16.msra.mxu0 %v814
    %993 = vmatprep.subr.bf16.mxu0 %v819
    %994 = vmatpush1.bf16.msra.mxu0 %v818
    %995 = vmatprep.subr.bf16.mxu0 %v823
    %996 = vmatpush1.bf16.msra.mxu0 %v822
    %997 = vmatprep.subr.bf16.mxu0 %v827
    %998 = vmatpush1.bf16.msra.mxu0 %v826
    %999 = vmatprep.subr.bf16.mxu0 %v831
    %1000 = vmatpush1.bf16.msra.mxu0 %v830
    %1001 = vmatprep.subr.bf16.mxu0 %v835
    %1002 = vmatpush1.bf16.msra.mxu0 %v834
    %1003 = vmatprep.subr.bf16.mxu0 %v839
    %1004 = vmatpush1.bf16.msra.mxu0 %v838
    %1005 = vmatprep.subr.bf16.mxu0 %v843
    %1006 = vmatpush1.bf16.msra.mxu0 %v842
    %1007 = vmatprep.subr.bf16.mxu0 %v847
    %1008 = vmatpush1.bf16.msra.mxu0 %v846
    %1009 = vmatprep.mubr.bf16.mxu0 %v655
    %1010 = vmatmul.mubr.bf16.gmra.mrb[0].mxu0 %v654
    %v1011 = vpop.f32.mrb[0].mxu0
    %v1012 = vadd.f32 %v969, %v1011
    %v1013 = vpop.f32.mrb[0].mxu0
    %v1014 = vadd.f32 %v971, %v1013
    %v1015 = vpop.f32.mrb[0].mxu0
    %v1016 = vadd.f32 %v973, %v1015
    %v1017 = vpop.f32.mrb[0].mxu0
    %v1018 = vadd.f32 %v975, %v1017
    %1019 = vdwg.mxu0
    %v1021 = vlaneseq
    %v1022 = vshrl.u32 %v1021, 7
    %v1023 = vsub.s32 0, %v1022
    %v1024 = vrot.slane %v90, %v1023
    %v1025 = vlaneseq
    %v1026 = vshrl.u32 %v1025, 7
    %v1027 = vsub.s32 1, %v1026
    %v1028 = vrot.slane %v90, %v1027
    %v1029 = vlaneseq
    %v1030 = vshrl.u32 %v1029, 7
    %v1031 = vsub.s32 2, %v1030
    %v1032 = vrot.slane %v90, %v1031
    %v1033 = vlaneseq
    %v1034 = vshrl.u32 %v1033, 7
    %v1035 = vsub.s32 3, %v1034
    %v1036 = vrot.slane %v90, %v1035
    %v1041 = vmul.f32 %v926, %v1024
    %v1042 = vmul.f32 %v928, %v1028
    %v1043 = vmul.f32 %v1012, %v1032
    %v1044 = vmul.f32 %v1014, %v1036
    %v1045 = vmul.f32 %v930, %v1024
    %v1046 = vmul.f32 %v932, %v1028
    %v1047 = vmul.f32 %v1016, %v1032
    %v1048 = vmul.f32 %v1018, %v1036
    %v1050 = vlaneseq
    %v1051 = vshrl.u32 %v1050, 7
    %v1052 = vsub.s32 0, %v1051
    %v1053 = vrot.slane %v84, %v1052
    %v1054 = vlaneseq
    %v1055 = vshrl.u32 %v1054, 7
    %v1056 = vsub.s32 1, %v1055
    %v1057 = vrot.slane %v84, %v1056
    %v1058 = vlaneseq
    %v1059 = vshrl.u32 %v1058, 7
    %v1060 = vsub.s32 2, %v1059
    %v1061 = vrot.slane %v84, %v1060
    %v1062 = vlaneseq
    %v1063 = vshrl.u32 %v1062, 7
    %v1064 = vsub.s32 3, %v1063
    %v1065 = vrot.slane %v84, %v1064
    %v1070 = vadd.f32 %v1041, %v1053
    %v1071 = vadd.f32 %v1042, %v1057
    %v1072 = vadd.f32 %v1043, %v1061
    %v1073 = vadd.f32 %v1044, %v1065
    %v1074 = vadd.f32 %v1045, %v1053
    %v1075 = vadd.f32 %v1046, %v1057
    %v1076 = vadd.f32 %v1047, %v1061
    %v1077 = vadd.f32 %v1048, %v1065
    %v1078 = vmul.f32 %v1070, 0.2
    %v1079 = vmul.f32 %v1071, 0.2
    %v1080 = vmul.f32 %v1072, 0.2
    %v1081 = vmul.f32 %v1073, 0.2
    %v1082 = vmul.f32 %v1074, 0.2
    %v1083 = vmul.f32 %v1075, 0.2
    %v1084 = vmul.f32 %v1076, 0.2
    %v1085 = vmul.f32 %v1077, 0.2
    %v1086 = vmax.f32 %v1070, %v1078
    %v1087 = vmax.f32 %v1071, %v1079
    %v1088 = vmax.f32 %v1072, %v1080
    %v1089 = vmax.f32 %v1073, %v1081
    %v1090 = vmax.f32 %v1074, %v1082
    %v1091 = vmax.f32 %v1075, %v1083
    %v1092 = vmax.f32 %v1076, %v1084
    %v1093 = vmax.f32 %v1077, %v1085
    %v1094 = vpack.c.bf16 %v1090, %v1086
    %v1095 = vpack.c.bf16 %v1091, %v1087
    %v1096 = vpack.c.bf16 %v1092, %v1088
    %v1097 = vpack.c.bf16 %v1093, %v1089
    %v1098 = vld [vmem:[#allocation7] sm:$0xff]
    %v1099 = vld [vmem:[#allocation7 + $0x8] sm:$0xff]
    %v1100 = vld [vmem:[#allocation7 + $0x10] sm:$0xff]
    %v1101 = vld [vmem:[#allocation7 + $0x18] sm:$0xff]
    %v1102 = vld [vmem:[#allocation7 + $0x20] sm:$0xff]
    %v1103 = vld [vmem:[#allocation7 + $0x28] sm:$0xff]
    %v1104 = vld [vmem:[#allocation7 + $0x30] sm:$0xff]
    %v1105 = vld [vmem:[#allocation7 + $0x38] sm:$0xff]
    %v1106 = vld [vmem:[#allocation7 + $0x40] sm:$0xff]
    %v1107 = vld [vmem:[#allocation7 + $0x48] sm:$0xff]
    %v1108 = vld [vmem:[#allocation7 + $0x50] sm:$0xff]
    %v1109 = vld [vmem:[#allocation7 + $0x58] sm:$0xff]
    %v1110 = vld [vmem:[#allocation7 + $0x60] sm:$0xff]
    %v1111 = vld [vmem:[#allocation7 + $0x68] sm:$0xff]
    %v1112 = vld [vmem:[#allocation7 + $0x70] sm:$0xff]
    %v1113 = vld [vmem:[#allocation7 + $0x78] sm:$0xff]
    %v1114 = vld [vmem:[#allocation7 + $0x80] sm:$0xff]
    %v1115 = vld [vmem:[#allocation7 + $0x88] sm:$0xff]
    %v1116 = vld [vmem:[#allocation7 + $0x90] sm:$0xff]
    %v1117 = vld [vmem:[#allocation7 + $0x98] sm:$0xff]
    %v1118 = vld [vmem:[#allocation7 + $0xa0] sm:$0xff]
    %v1119 = vld [vmem:[#allocation7 + $0xa8] sm:$0xff]
    %v1120 = vld [vmem:[#allocation7 + $0xb0] sm:$0xff]
    %v1121 = vld [vmem:[#allocation7 + $0xb8] sm:$0xff]
    %v1122 = vld [vmem:[#allocation7 + $0xc0] sm:$0xff]
    %v1123 = vld [vmem:[#allocation7 + $0xc8] sm:$0xff]
    %v1124 = vld [vmem:[#allocation7 + $0xd0] sm:$0xff]
    %v1125 = vld [vmem:[#allocation7 + $0xd8] sm:$0xff]
    %v1126 = vld [vmem:[#allocation7 + $0xe0] sm:$0xff]
    %v1127 = vld [vmem:[#allocation7 + $0xe8] sm:$0xff]
    %v1128 = vld [vmem:[#allocation7 + $0xf0] sm:$0xff]
    %v1129 = vld [vmem:[#allocation7 + $0xf8] sm:$0xff]
    %v1130 = vld [vmem:[#allocation7 + $0x100] sm:$0xff]
    %v1131 = vld [vmem:[#allocation7 + $0x108] sm:$0xff]
    %v1132 = vld [vmem:[#allocation7 + $0x110] sm:$0xff]
    %v1133 = vld [vmem:[#allocation7 + $0x118] sm:$0xff]
    %v1134 = vld [vmem:[#allocation7 + $0x120] sm:$0xff]
    %v1135 = vld [vmem:[#allocation7 + $0x128] sm:$0xff]
    %v1136 = vld [vmem:[#allocation7 + $0x130] sm:$0xff]
    %v1137 = vld [vmem:[#allocation7 + $0x138] sm:$0xff]
    %v1138 = vld [vmem:[#allocation7 + $0x140] sm:$0xff]
    %v1139 = vld [vmem:[#allocation7 + $0x148] sm:$0xff]
    %v1140 = vld [vmem:[#allocation7 + $0x150] sm:$0xff]
    %v1141 = vld [vmem:[#allocation7 + $0x158] sm:$0xff]
    %v1142 = vld [vmem:[#allocation7 + $0x160] sm:$0xff]
    %v1143 = vld [vmem:[#allocation7 + $0x168] sm:$0xff]
    %v1144 = vld [vmem:[#allocation7 + $0x170] sm:$0xff]
    %v1145 = vld [vmem:[#allocation7 + $0x178] sm:$0xff]
    %v1146 = vld [vmem:[#allocation7 + $0x180] sm:$0xff]
    %v1147 = vld [vmem:[#allocation7 + $0x188] sm:$0xff]
    %v1148 = vld [vmem:[#allocation7 + $0x190] sm:$0xff]
    %v1149 = vld [vmem:[#allocation7 + $0x198] sm:$0xff]
    %v1150 = vld [vmem:[#allocation7 + $0x1a0] sm:$0xff]
    %v1151 = vld [vmem:[#allocation7 + $0x1a8] sm:$0xff]
    %v1152 = vld [vmem:[#allocation7 + $0x1b0] sm:$0xff]
    %v1153 = vld [vmem:[#allocation7 + $0x1b8] sm:$0xff]
    %v1154 = vld [vmem:[#allocation7 + $0x1c0] sm:$0xff]
    %v1155 = vld [vmem:[#allocation7 + $0x1c8] sm:$0xff]
    %v1156 = vld [vmem:[#allocation7 + $0x1d0] sm:$0xff]
    %v1157 = vld [vmem:[#allocation7 + $0x1d8] sm:$0xff]
    %v1158 = vld [vmem:[#allocation7 + $0x1e0] sm:$0xff]
    %v1159 = vld [vmem:[#allocation7 + $0x1e8] sm:$0xff]
    %v1160 = vld [vmem:[#allocation7 + $0x1f0] sm:$0xff]
    %v1161 = vld [vmem:[#allocation7 + $0x1f8] sm:$0xff]
    %v1162 = vunpack.c.l.s8.bf16 %v1098
    %v1163 = vunpack.c.l.s8.bf16 %v1099
    %v1164 = vunpack.c.l.s8.bf16 %v1100
    %v1165 = vunpack.c.l.s8.bf16 %v1101
    %v1166 = vunpack.c.h.s8.bf16 %v1098
    %v1167 = vunpack.c.h.s8.bf16 %v1099
    %v1168 = vunpack.c.h.s8.bf16 %v1100
    %v1169 = vunpack.c.h.s8.bf16 %v1101
    %v1170 = vunpack.c.l.s8.bf16 %v1102
    %v1171 = vunpack.c.l.s8.bf16 %v1103
    %v1172 = vunpack.c.l.s8.bf16 %v1104
    %v1173 = vunpack.c.l.s8.bf16 %v1105
    %v1174 = vunpack.c.h.s8.bf16 %v1102
    %v1175 = vunpack.c.h.s8.bf16 %v1103
    %v1176 = vunpack.c.h.s8.bf16 %v1104
    %v1177 = vunpack.c.h.s8.bf16 %v1105
    %v1178 = vunpack.c.l.s8.bf16 %v1106
    %v1179 = vunpack.c.l.s8.bf16 %v1107
    %v1180 = vunpack.c.l.s8.bf16 %v1108
    %v1181 = vunpack.c.l.s8.bf16 %v1109
    %v1182 = vunpack.c.h.s8.bf16 %v1106
    %v1183 = vunpack.c.h.s8.bf16 %v1107
    %v1184 = vunpack.c.h.s8.bf16 %v1108
    %v1185 = vunpack.c.h.s8.bf16 %v1109
    %v1186 = vunpack.c.l.s8.bf16 %v1110
    %v1187 = vunpack.c.l.s8.bf16 %v1111
    %v1188 = vunpack.c.l.s8.bf16 %v1112
    %v1189 = vunpack.c.l.s8.bf16 %v1113
    %v1190 = vunpack.c.h.s8.bf16 %v1110
    %v1191 = vunpack.c.h.s8.bf16 %v1111
    %v1192 = vunpack.c.h.s8.bf16 %v1112
    %v1193 = vunpack.c.h.s8.bf16 %v1113
    %v1194 = vunpack.c.l.s8.bf16 %v1114
    %v1195 = vunpack.c.l.s8.bf16 %v1115
    %v1196 = vunpack.c.l.s8.bf16 %v1116
    %v1197 = vunpack.c.l.s8.bf16 %v1117
    %v1198 = vunpack.c.h.s8.bf16 %v1114
    %v1199 = vunpack.c.h.s8.bf16 %v1115
    %v1200 = vunpack.c.h.s8.bf16 %v1116
    %v1201 = vunpack.c.h.s8.bf16 %v1117
    %v1202 = vunpack.c.l.s8.bf16 %v1118
    %v1203 = vunpack.c.l.s8.bf16 %v1119
    %v1204 = vunpack.c.l.s8.bf16 %v1120
    %v1205 = vunpack.c.l.s8.bf16 %v1121
    %v1206 = vunpack.c.h.s8.bf16 %v1118
    %v1207 = vunpack.c.h.s8.bf16 %v1119
    %v1208 = vunpack.c.h.s8.bf16 %v1120
    %v1209 = vunpack.c.h.s8.bf16 %v1121
    %v1210 = vunpack.c.l.s8.bf16 %v1122
    %v1211 = vunpack.c.l.s8.bf16 %v1123
    %v1212 = vunpack.c.l.s8.bf16 %v1124
    %v1213 = vunpack.c.l.s8.bf16 %v1125
    %v1214 = vunpack.c.h.s8.bf16 %v1122
    %v1215 = vunpack.c.h.s8.bf16 %v1123
    %v1216 = vunpack.c.h.s8.bf16 %v1124
    %v1217 = vunpack.c.h.s8.bf16 %v1125
    %v1218 = vunpack.c.l.s8.bf16 %v1126
    %v1219 = vunpack.c.l.s8.bf16 %v1127
    %v1220 = vunpack.c.l.s8.bf16 %v1128
    %v1221 = vunpack.c.l.s8.bf16 %v1129
    %v1222 = vunpack.c.h.s8.bf16 %v1126
    %v1223 = vunpack.c.h.s8.bf16 %v1127
    %v1224 = vunpack.c.h.s8.bf16 %v1128
    %v1225 = vunpack.c.h.s8.bf16 %v1129
    %v1226 = vunpack.c.l.s8.bf16 %v1130
    %v1227 = vunpack.c.l.s8.bf16 %v1131
    %v1228 = vunpack.c.l.s8.bf16 %v1132
    %v1229 = vunpack.c.l.s8.bf16 %v1133
    %v1230 = vunpack.c.h.s8.bf16 %v1130
    %v1231 = vunpack.c.h.s8.bf16 %v1131
    %v1232 = vunpack.c.h.s8.bf16 %v1132
    %v1233 = vunpack.c.h.s8.bf16 %v1133
    %v1234 = vunpack.c.l.s8.bf16 %v1134
    %v1235 = vunpack.c.l.s8.bf16 %v1135
    %v1236 = vunpack.c.l.s8.bf16 %v1136
    %v1237 = vunpack.c.l.s8.bf16 %v1137
    %v1238 = vunpack.c.h.s8.bf16 %v1134
    %v1239 = vunpack.c.h.s8.bf16 %v1135
    %v1240 = vunpack.c.h.s8.bf16 %v1136
    %v1241 = vunpack.c.h.s8.bf16 %v1137
    %v1242 = vunpack.c.l.s8.bf16 %v1138
    %v1243 = vunpack.c.l.s8.bf16 %v1139
    %v1244 = vunpack.c.l.s8.bf16 %v1140
    %v1245 = vunpack.c.l.s8.bf16 %v1141
    %v1246 = vunpack.c.h.s8.bf16 %v1138
    %v1247 = vunpack.c.h.s8.bf16 %v1139
    %v1248 = vunpack.c.h.s8.bf16 %v1140
    %v1249 = vunpack.c.h.s8.bf16 %v1141
    %v1250 = vunpack.c.l.s8.bf16 %v1142
    %v1251 = vunpack.c.l.s8.bf16 %v1143
    %v1252 = vunpack.c.l.s8.bf16 %v1144
    %v1253 = vunpack.c.l.s8.bf16 %v1145
    %v1254 = vunpack.c.h.s8.bf16 %v1142
    %v1255 = vunpack.c.h.s8.bf16 %v1143
    %v1256 = vunpack.c.h.s8.bf16 %v1144
    %v1257 = vunpack.c.h.s8.bf16 %v1145
    %v1258 = vunpack.c.l.s8.bf16 %v1146
    %v1259 = vunpack.c.l.s8.bf16 %v1147
    %v1260 = vunpack.c.l.s8.bf16 %v1148
    %v1261 = vunpack.c.l.s8.bf16 %v1149
    %v1262 = vunpack.c.h.s8.bf16 %v1146
    %v1263 = vunpack.c.h.s8.bf16 %v1147
    %v1264 = vunpack.c.h.s8.bf16 %v1148
    %v1265 = vunpack.c.h.s8.bf16 %v1149
    %v1266 = vunpack.c.l.s8.bf16 %v1150
    %v1267 = vunpack.c.l.s8.bf16 %v1151
    %v1268 = vunpack.c.l.s8.bf16 %v1152
    %v1269 = vunpack.c.l.s8.bf16 %v1153
    %v1270 = vunpack.c.h.s8.bf16 %v1150
    %v1271 = vunpack.c.h.s8.bf16 %v1151
    %v1272 = vunpack.c.h.s8.bf16 %v1152
    %v1273 = vunpack.c.h.s8.bf16 %v1153
    %v1274 = vunpack.c.l.s8.bf16 %v1154
    %v1275 = vunpack.c.l.s8.bf16 %v1155
    %v1276 = vunpack.c.l.s8.bf16 %v1156
    %v1277 = vunpack.c.l.s8.bf16 %v1157
    %v1278 = vunpack.c.h.s8.bf16 %v1154
    %v1279 = vunpack.c.h.s8.bf16 %v1155
    %v1280 = vunpack.c.h.s8.bf16 %v1156
    %v1281 = vunpack.c.h.s8.bf16 %v1157
    %v1282 = vunpack.c.l.s8.bf16 %v1158
    %v1283 = vunpack.c.l.s8.bf16 %v1159
    %v1284 = vunpack.c.l.s8.bf16 %v1160
    %v1285 = vunpack.c.l.s8.bf16 %v1161
    %v1286 = vunpack.c.h.s8.bf16 %v1158
    %v1287 = vunpack.c.h.s8.bf16 %v1159
    %v1288 = vunpack.c.h.s8.bf16 %v1160
    %v1289 = vunpack.c.h.s8.bf16 %v1161
    %1290 = vmatprep.subr.bf16.mxu0 %v1163
    %1291 = vmatpush1.bf16.msra.mxu0 %v1162
    %1292 = vmatprep.subr.bf16.mxu0 %v1167
    %1293 = vmatpush1.bf16.msra.mxu0 %v1166
    %1294 = vmatprep.subr.bf16.mxu0 %v1171
    %1295 = vmatpush1.bf16.msra.mxu0 %v1170
    %1296 = vmatprep.subr.bf16.mxu0 %v1175
    %1297 = vmatpush1.bf16.msra.mxu0 %v1174
    %1298 = vmatprep.subr.bf16.mxu0 %v1179
    %1299 = vmatpush1.bf16.msra.mxu0 %v1178
    %1300 = vmatprep.subr.bf16.mxu0 %v1183
    %1301 = vmatpush1.bf16.msra.mxu0 %v1182
    %1302 = vmatprep.subr.bf16.mxu0 %v1187
    %1303 = vmatpush1.bf16.msra.mxu0 %v1186
    %1304 = vmatprep.subr.bf16.mxu0 %v1191
    %1305 = vmatpush1.bf16.msra.mxu0 %v1190
    %1306 = vmatprep.subr.bf16.mxu0 %v1195
    %1307 = vmatpush1.bf16.msra.mxu0 %v1194
    %1308 = vmatprep.subr.bf16.mxu0 %v1199
    %1309 = vmatpush1.bf16.msra.mxu0 %v1198
    %1310 = vmatprep.subr.bf16.mxu0 %v1203
    %1311 = vmatpush1.bf16.msra.mxu0 %v1202
    %1312 = vmatprep.subr.bf16.mxu0 %v1207
    %1313 = vmatpush1.bf16.msra.mxu0 %v1206
    %1314 = vmatprep.subr.bf16.mxu0 %v1211
    %1315 = vmatpush1.bf16.msra.mxu0 %v1210
    %1316 = vmatprep.subr.bf16.mxu0 %v1215
    %1317 = vmatpush1.bf16.msra.mxu0 %v1214
    %1318 = vmatprep.subr.bf16.mxu0 %v1219
    %1319 = vmatpush1.bf16.msra.mxu0 %v1218
    %1320 = vmatprep.subr.bf16.mxu0 %v1223
    %1321 = vmatpush1.bf16.msra.mxu0 %v1222
    %1322 = vmatprep.mubr.bf16.mxu0 %v1095
    %1323 = vmatmul.mubr.bf16.gmra.mrb[0].mxu0 %v1094
    %v1324 = vpop.f32.mrb[0].mxu0
    %v1325 = vadd.f32 0.0, %v1324
    %v1326 = vpop.f32.mrb[0].mxu0
    %v1327 = vadd.f32 0.0, %v1326
    %v1328 = vpop.f32.mrb[0].mxu0
    %v1329 = vadd.f32 0.0, %v1328
    %v1330 = vpop.f32.mrb[0].mxu0
    %v1331 = vadd.f32 0.0, %v1330
    %1332 = vdwg.mxu0
    %1333 = vmatprep.subr.bf16.mxu0 %v1227
    %1334 = vmatpush1.bf16.msra.mxu0 %v1226
    %1335 = vmatprep.subr.bf16.mxu0 %v1231
    %1336 = vmatpush1.bf16.msra.mxu0 %v1230
    %1337 = vmatprep.subr.bf16.mxu0 %v1235
    %1338 = vmatpush1.bf16.msra.mxu0 %v1234
    %1339 = vmatprep.subr.bf16.mxu0 %v1239
    %1340 = vmatpush1.bf16.msra.mxu0 %v1238
    %1341 = vmatprep.subr.bf16.mxu0 %v1243
    %1342 = vmatpush1.bf16.msra.mxu0 %v1242
    %1343 = vmatprep.subr.bf16.mxu0 %v1247
    %1344 = vmatpush1.bf16.msra.mxu0 %v1246
    %1345 = vmatprep.subr.bf16.mxu0 %v1251
    %1346 = vmatpush1.bf16.msra.mxu0 %v1250
    %1347 = vmatprep.subr.bf16.mxu0 %v1255
    %1348 = vmatpush1.bf16.msra.mxu0 %v1254
    %1349 = vmatprep.subr.bf16.mxu0 %v1259
    %1350 = vmatpush1.bf16.msra.mxu0 %v1258
    %1351 = vmatprep.subr.bf16.mxu0 %v1263
    %1352 = vmatpush1.bf16.msra.mxu0 %v1262
    %1353 = vmatprep.subr.bf16.mxu0 %v1267
    %1354 = vmatpush1.bf16.msra.mxu0 %v1266
    %1355 = vmatprep.subr.bf16.mxu0 %v1271
    %1356 = vmatpush1.bf16.msra.mxu0 %v1270
    %1357 = vmatprep.subr.bf16.mxu0 %v1275
    %1358 = vmatpush1.bf16.msra.mxu0 %v1274
    %1359 = vmatprep.subr.bf16.mxu0 %v1279
    %1360 = vmatpush1.bf16.msra.mxu0 %v1278
    %1361 = vmatprep.subr.bf16.mxu0 %v1283
    %1362 = vmatpush1.bf16.msra.mxu0 %v1282
    %1363 = vmatprep.subr.bf16.mxu0 %v1287
    %1364 = vmatpush1.bf16.msra.mxu0 %v1286
    %1365 = vmatprep.mubr.bf16.mxu0 %v1097
    %1366 = vmatmul.mubr.bf16.gmra.mrb[0].mxu0 %v1096
    %v1367 = vpop.f32.mrb[0].mxu0
    %v1368 = vadd.f32 %v1325, %v1367
    %v1369 = vpop.f32.mrb[0].mxu0
    %v1370 = vadd.f32 %v1327, %v1369
    %v1371 = vpop.f32.mrb[0].mxu0
    %v1372 = vadd.f32 %v1329, %v1371
    %v1373 = vpop.f32.mrb[0].mxu0
    %v1374 = vadd.f32 %v1331, %v1373
    %1375 = vdwg.mxu0
    %1376 = vmatprep.subr.bf16.mxu0 %v1165
    %1377 = vmatpush1.bf16.msra.mxu0 %v1164
    %1378 = vmatprep.subr.bf16.mxu0 %v1169
    %1379 = vmatpush1.bf16.msra.mxu0 %v1168
    %1380 = vmatprep.subr.bf16.mxu0 %v1173
    %1381 = vmatpush1.bf16.msra.mxu0 %v1172
    %1382 = vmatprep.subr.bf16.mxu0 %v1177
    %1383 = vmatpush1.bf16.msra.mxu0 %v1176
    %1384 = vmatprep.subr.bf16.mxu0 %v1181
    %1385 = vmatpush1.bf16.msra.mxu0 %v1180
    %1386 = vmatprep.subr.bf16.mxu0 %v1185
    %1387 = vmatpush1.bf16.msra.mxu0 %v1184
    %1388 = vmatprep.subr.bf16.mxu0 %v1189
    %1389 = vmatpush1.bf16.msra.mxu0 %v1188
    %1390 = vmatprep.subr.bf16.mxu0 %v1193
    %1391 = vmatpush1.bf16.msra.mxu0 %v1192
    %1392 = vmatprep.subr.bf16.mxu0 %v1197
    %1393 = vmatpush1.bf16.msra.mxu0 %v1196
    %1394 = vmatprep.subr.bf16.mxu0 %v1201
    %1395 = vmatpush1.bf16.msra.mxu0 %v1200
    %1396 = vmatprep.subr.bf16.mxu0 %v1205
    %1397 = vmatpush1.bf16.msra.mxu0 %v1204
    %1398 = vmatprep.subr.bf16.mxu0 %v1209
    %1399 = vmatpush1.bf16.msra.mxu0 %v1208
    %1400 = vmatprep.subr.bf16.mxu0 %v1213
    %1401 = vmatpush1.bf16.msra.mxu0 %v1212
    %1402 = vmatprep.subr.bf16.mxu0 %v1217
    %1403 = vmatpush1.bf16.msra.mxu0 %v1216
    %1404 = vmatprep.subr.bf16.mxu0 %v1221
    %1405 = vmatpush1.bf16.msra.mxu0 %v1220
    %1406 = vmatprep.subr.bf16.mxu0 %v1225
    %1407 = vmatpush1.bf16.msra.mxu0 %v1224
    %1408 = vmatprep.mubr.bf16.mxu0 %v1095
    %1409 = vmatmul.mubr.bf16.gmra.mrb[0].mxu0 %v1094
    %v1410 = vpop.f32.mrb[0].mxu0
    %v1411 = vadd.f32 0.0, %v1410
    %v1412 = vpop.f32.mrb[0].mxu0
    %v1413 = vadd.f32 0.0, %v1412
    %v1414 = vpop.f32.mrb[0].mxu0
    %v1415 = vadd.f32 0.0, %v1414
    %v1416 = vpop.f32.mrb[0].mxu0
    %v1417 = vadd.f32 0.0, %v1416
    %1418 = vdwg.mxu0
    %1419 = vmatprep.subr.bf16.mxu0 %v1229
    %1420 = vmatpush1.bf16.msra.mxu0 %v1228
    %1421 = vmatprep.subr.bf16.mxu0 %v1233
    %1422 = vmatpush1.bf16.msra.mxu0 %v1232
    %1423 = vmatprep.subr.bf16.mxu0 %v1237
    %1424 = vmatpush1.bf16.msra.mxu0 %v1236
    %1425 = vmatprep.subr.bf16.mxu0 %v1241
    %1426 = vmatpush1.bf16.msra.mxu0 %v1240
    %1427 = vmatprep.subr.bf16.mxu0 %v1245
    %1428 = vmatpush1.bf16.msra.mxu0 %v1244
    %1429 = vmatprep.subr.bf16.mxu0 %v1249
    %1430 = vmatpush1.bf16.msra.mxu0 %v1248
    %1431 = vmatprep.subr.bf16.mxu0 %v1253
    %1432 = vmatpush1.bf16.msra.mxu0 %v1252
    %1433 = vmatprep.subr.bf16.mxu0 %v1257
    %1434 = vmatpush1.bf16.msra.mxu0 %v1256
    %1435 = vmatprep.subr.bf16.mxu0 %v1261
    %1436 = vmatpush1.bf16.msra.mxu0 %v1260
    %1437 = vmatprep.subr.bf16.mxu0 %v1265
    %1438 = vmatpush1.bf16.msra.mxu0 %v1264
    %1439 = vmatprep.subr.bf16.mxu0 %v1269
    %1440 = vmatpush1.bf16.msra.mxu0 %v1268
    %1441 = vmatprep.subr.bf16.mxu0 %v1273
    %1442 = vmatpush1.bf16.msra.mxu0 %v1272
    %1443 = vmatprep.subr.bf16.mxu0 %v1277
    %1444 = vmatpush1.bf16.msra.mxu0 %v1276
    %1445 = vmatprep.subr.bf16.mxu0 %v1281
    %1446 = vmatpush1.bf16.msra.mxu0 %v1280
    %1447 = vmatprep.subr.bf16.mxu0 %v1285
    %1448 = vmatpush1.bf16.msra.mxu0 %v1284
    %1449 = vmatprep.subr.bf16.mxu0 %v1289
    %1450 = vmatpush1.bf16.msra.mxu0 %v1288
    %1451 = vmatprep.mubr.bf16.mxu0 %v1097
    %1452 = vmatmul.mubr.bf16.gmra.mrb[0].mxu0 %v1096
    %v1453 = vpop.f32.mrb[0].mxu0
    %v1454 = vadd.f32 %v1411, %v1453
    %v1455 = vpop.f32.mrb[0].mxu0
    %v1456 = vadd.f32 %v1413, %v1455
    %v1457 = vpop.f32.mrb[0].mxu0
    %v1458 = vadd.f32 %v1415, %v1457
    %v1459 = vpop.f32.mrb[0].mxu0
    %v1460 = vadd.f32 %v1417, %v1459
    %1461 = vdwg.mxu0
    %v1463 = vlaneseq
    %v1464 = vshrl.u32 %v1463, 7
    %v1465 = vsub.s32 0, %v1464
    %v1466 = vrot.slane %v92, %v1465
    %v1467 = vlaneseq
    %v1468 = vshrl.u32 %v1467, 7
    %v1469 = vsub.s32 1, %v1468
    %v1470 = vrot.slane %v92, %v1469
    %v1471 = vlaneseq
    %v1472 = vshrl.u32 %v1471, 7
    %v1473 = vsub.s32 2, %v1472
    %v1474 = vrot.slane %v92, %v1473
    %v1475 = vlaneseq
    %v1476 = vshrl.u32 %v1475, 7
    %v1477 = vsub.s32 3, %v1476
    %v1478 = vrot.slane %v92, %v1477
    %v1483 = vmul.f32 %v1368, %v1466
    %v1484 = vmul.f32 %v1370, %v1470
    %v1485 = vmul.f32 %v1454, %v1474
    %v1486 = vmul.f32 %v1456, %v1478
    %v1487 = vmul.f32 %v1372, %v1466
    %v1488 = vmul.f32 %v1374, %v1470
    %v1489 = vmul.f32 %v1458, %v1474
    %v1490 = vmul.f32 %v1460, %v1478
    %v1492 = vlaneseq
    %v1493 = vshrl.u32 %v1492, 7
    %v1494 = vsub.s32 0, %v1493
    %v1495 = vrot.slane %v86, %v1494
    %v1496 = vlaneseq
    %v1497 = vshrl.u32 %v1496, 7
    %v1498 = vsub.s32 1, %v1497
    %v1499 = vrot.slane %v86, %v1498
    %v1500 = vlaneseq
    %v1501 = vshrl.u32 %v1500, 7
    %v1502 = vsub.s32 2, %v1501
    %v1503 = vrot.slane %v86, %v1502
    %v1504 = vlaneseq
    %v1505 = vshrl.u32 %v1504, 7
    %v1506 = vsub.s32 3, %v1505
    %v1507 = vrot.slane %v86, %v1506
    %v1512 = vadd.f32 %v1483, %v1495
    %v1513 = vadd.f32 %v1484, %v1499
    %v1514 = vadd.f32 %v1485, %v1503
    %v1515 = vadd.f32 %v1486, %v1507
    %v1516 = vadd.f32 %v1487, %v1495
    %v1517 = vadd.f32 %v1488, %v1499
    %v1518 = vadd.f32 %v1489, %v1503
    %v1519 = vadd.f32 %v1490, %v1507
    %v1520 = vmul.f32 %v1512, 0.2
    %v1521 = vmul.f32 %v1513, 0.2
    %v1522 = vmul.f32 %v1514, 0.2
    %v1523 = vmul.f32 %v1515, 0.2
    %v1524 = vmul.f32 %v1516, 0.2
    %v1525 = vmul.f32 %v1517, 0.2
    %v1526 = vmul.f32 %v1518, 0.2
    %v1527 = vmul.f32 %v1519, 0.2
    %v1528 = vmax.f32 %v1512, %v1520
    %v1529 = vmax.f32 %v1513, %v1521
    %v1530 = vmax.f32 %v1514, %v1522
    %v1531 = vmax.f32 %v1515, %v1523
    %v1532 = vmax.f32 %v1516, %v1524
    %v1533 = vmax.f32 %v1517, %v1525
    %v1534 = vmax.f32 %v1518, %v1526
    %v1535 = vmax.f32 %v1519, %v1527
    %v1537 = vlaneseq
    %v1538 = vshrl.u32 %v1537, 7
    %v1539 = vsub.s32 0, %v1538
    %v1540 = vrot.slane %v94, %v1539
    %v1541 = vlaneseq
    %v1542 = vshrl.u32 %v1541, 7
    %v1543 = vsub.s32 1, %v1542
    %v1544 = vrot.slane %v94, %v1543
    %v1545 = vlaneseq
    %v1546 = vshrl.u32 %v1545, 7
    %v1547 = vsub.s32 2, %v1546
    %v1548 = vrot.slane %v94, %v1547
    %v1549 = vlaneseq
    %v1550 = vshrl.u32 %v1549, 7
    %v1551 = vsub.s32 3, %v1550
    %v1552 = vrot.slane %v94, %v1551
    %v1557 = vmul.f32 %v1528, %v1540
    %v1558 = vmul.f32 %v1529, %v1544
    %v1559 = vmul.f32 %v1530, %v1548
    %v1560 = vmul.f32 %v1531, %v1552
    %v1561 = vmul.f32 %v1532, %v1540
    %v1562 = vmul.f32 %v1533, %v1544
    %v1563 = vmul.f32 %v1534, %v1548
    %v1564 = vmul.f32 %v1535, %v1552
    %v1565 = vadd.f32 %v1557, %v1558
    %v1566 = vadd.f32 %v1565, %v1559
    %v1567 = vadd.f32 %v1566, %v1560
    %1568 = vadd.xlane.f32.xlu0 %v1567
    %v1569 = vpop.xlane.xlu0 %1568
    %v1570 = vadd.f32 %v1561, %v1562
    %v1571 = vadd.f32 %v1570, %v1563
    %v1572 = vadd.f32 %v1571, %v1564
    %1573 = vadd.xlane.f32.xlu0 %v1572
    %v1574 = vpop.xlane.xlu0 %1573
    %v1575 = vadd.f32 %v1569, %v95
    %v1576 = vadd.f32 %v1574, %v95
    %v1577 = vxor.u32 %v1575, 2147483648
    %v1578 = vxor.u32 %v1576, 2147483648
    %v1579 = vmul.f32 %v1577, 1.442695
    %v1580 = vpow.pop %v1579
    %v1581 = vmul.f32 %v1578, 1.442695
    %v1582 = vpow.pop %v1581
    %v1583 = vadd.f32 %v1580, 1.0
    %v1584 = vadd.f32 %v1582, 1.0
    %v1585 = vrcp.pop %v1583
    %v1586 = vmul.f32 1.0, %v1585
    %v1587 = vrcp.pop %v1584
    %v1588 = vmul.f32 1.0, %v1587
    %1590 = vset.pattern.permute.xlu0 0
    %1591 = vperm.xlu0 %1590, %v1586
    %v1592 = vpop.permute.xlu0 %1591
    %1595 = vset.pattern.permute.xlu0 0
    %1596 = vperm.xlu0 %1595, %v1588
    %v1597 = vpop.permute.xlu0 %1596
    %1599 = vst [vmem:[%s7] sm:$0xff] %v1592
    %1600 = vst [vmem:[%s7 + $0x8] sm:$0xff] %v1597
    // Predicated region
    $region46: #{discriminator_forward.1} parent=1 // pred_check
      _
    $region47: #{discriminator_forward.1} parent=1 // pred_check_branch
      %1602 = sbr.rel (0) target = $region49
    $region48: #{discriminator_forward.1} parent=1 // pred_region
      _
    $region49: #{discriminator_forward.1} parent=1 // pred_fallthru
      _
    // Predicated region
    $region50: #{discriminator_forward.1} parent=1 // pred_check
      _
    $region51: #{discriminator_forward.1} parent=1 // pred_check_branch
      %1604 = sbr.rel (0) target = $region53
    $region52: #{discriminator_forward.1} parent=1 // pred_region
      _
    $region53: #{discriminator_forward.1} parent=1 // pred_fallthru
      _
    %1605 = vsyncpa [#allocation3], 1
    %1606 = vsyncpa [#allocation5], 1
    %1607 = vsyncpa [#allocation8], 1

</llo_original>
